<compile_context>
chip_gen: v7x
topology: tpu7x:2x2x1
jax: 0.10.0
libtpu: 0.0.40
codegen_flags: <defaults>
</compile_context>

<pallas_src>
import math
import functools

import jax
import jax.numpy as jnp
from jax.experimental import pallas as pl
from jax.experimental.pallas import tpu as pltpu


def _round_up(x, m):
    return (x + m - 1) // m * m


def _lstm_block_kernel(x_ref, wih_ref, whh_ref, b_ref, h0_ref, c0_ref,
                       out_ref, hn_ref, cn_ref,
                       h_sc, c_sc,
                       *, hidden_pad, time_block, seq_len, compute_dtype):
    """One (batch-block, time-block) tile of the LSTM recurrence.

    Grid = (batch_blocks [parallel], time_blocks [sequential/arbitrary]).
    h/c carries live in f32 VMEM scratch and persist across time blocks.
    """
    tblk = pl.program_id(1)
    n_tblk = pl.num_programs(1)

    Hp = hidden_pad
    TB = time_block
    tb = h_sc.shape[0]                    # batch rows in this block
    I = x_ref.shape[2]

    @pl.when(tblk == 0)
    def _():
        h_sc[...] = h0_ref[...].astype(jnp.float32)
        c_sc[...] = c0_ref[...].astype(jnp.float32)

    # ---- hoisted, time-independent input projection for the whole block ----
    # One (TB*tb, I) @ (I, 4Hp) matmul on the MXU (bias folded in once) instead
    # of TB tiny per-step matmuls + per-step bias broadcasts.
    x2d = x_ref[...].reshape(TB * tb, I)
    gates_x = jnp.dot(x2d, wih_ref[...], preferred_element_type=jnp.float32)
    gates_x = gates_x + b_ref[...]        # (1, 4Hp) broadcast, once per block

    h = h_sc[...]
    c = c_sc[...]
    whh = whh_ref[...]

    ragged = (seq_len % TB) != 0          # trace-time constant

    # Short static unrolled inner loop over the time block; only the small
    # recurrence matmul + gate nonlinearities remain on the serial path.
    for s in range(TB):
        gx = gates_x[s * tb:(s + 1) * tb, :]          # sublane-aligned view
        gates = gx + jnp.dot(h.astype(compute_dtype), whh,
                             preferred_element_type=jnp.float32)
        # Hp is a multiple of 128 -> these slices are free lane-aligned views.
        i_g = jax.nn.sigmoid(gates[:, 0 * Hp:1 * Hp])
        f_g = jax.nn.sigmoid(gates[:, 1 * Hp:2 * Hp])
        g_g = jnp.tanh(gates[:, 2 * Hp:3 * Hp])
        o_g = jax.nn.sigmoid(gates[:, 3 * Hp:4 * Hp])
        c_new = f_g * c + i_g * g_g
        h_new = o_g * jnp.tanh(c_new)
        if ragged:
            valid = (tblk * TB + s) < seq_len
            h = jnp.where(valid, h_new, h)
            c = jnp.where(valid, c_new, c)
        else:
            h, c = h_new, c_new
        out_ref[s] = h.astype(out_ref.dtype)          # lane-dense (tb, Hp) row

    h_sc[...] = h
    c_sc[...] = c

    # Final states are written only once, on the last time block.
    @pl.when(tblk == n_tblk - 1)
    def _():
        hn_ref[...] = h.astype(hn_ref.dtype)
        cn_ref[...] = c.astype(cn_ref.dtype)


def lstm_layer_pallas(x, w_ih, w_hh, b_ih, b_hh, h0, c0, *,
                      time_block=16, batch_block=256,
                      compute_dtype=jnp.float32, out_dtype=jnp.float32):
    """One unidirectional LSTM layer over the full sequence.

    x: (T, B, I); w_ih: (4H, I); w_hh: (4H, H); b_*: (4H,); h0/c0: (B, H).
    Returns output (T, B, H) and final (h_n, c_n), each (B, H).
    """
    T, B, I = x.shape
    H = h0.shape[-1]

    Hp = _round_up(H, 128)                 # lane-aligned hidden dim
    G = 4 * Hp
    Bp = _round_up(B, 8)                   # sublane-aligned batch
    TB = min(time_block, T)
    tb = min(Bp, _round_up(batch_block, 8))
    while Bp % tb != 0:                    # batch blocks must tile Bp evenly
        tb -= 8
    n_bblk = Bp // tb
    n_tblk = pl.cdiv(T, TB)

    # ---- pad / retile parameters (gate axis padded per-gate to Hp) ----
    wih_t = jnp.transpose(w_ih).reshape(I, 4, H)                       # (I,4,H)
    wih_t = jnp.pad(wih_t, ((0, 0), (0, 0), (0, Hp - H))).reshape(I, G)
    whh_t = jnp.transpose(w_hh).reshape(H, 4, H)
    whh_t = jnp.pad(whh_t, ((0, 0), (0, 0), (0, Hp - H))).reshape(H, G)
    whh_t = jnp.pad(whh_t, ((0, Hp - H), (0, 0)))                      # (Hp,G)
    bias = (b_ih + b_hh).astype(jnp.float32).reshape(4, H)
    bias = jnp.pad(bias, ((0, 0), (0, Hp - H))).reshape(1, G)

    wih_t = wih_t.astype(compute_dtype)    # bf16 halves weight VMEM + 2x MXU
    whh_t = whh_t.astype(compute_dtype)

    x_p = x.astype(compute_dtype)
    if Bp != B:
        x_p = jnp.pad(x_p, ((0, 0), (0, Bp - B), (0, 0)))
    h0_p = jnp.pad(h0.astype(jnp.float32), ((0, Bp - B), (0, Hp - H)))
    c0_p = jnp.pad(c0.astype(jnp.float32), ((0, Bp - B), (0, Hp - H)))

    kernel = functools.partial(_lstm_block_kernel,
                               hidden_pad=Hp, time_block=TB,
                               seq_len=T, compute_dtype=compute_dtype)

    out_shapes = (
        jax.ShapeDtypeStruct((T, Bp, Hp), out_dtype),   # per-step hidden states
        jax.ShapeDtypeStruct((Bp, Hp), out_dtype),      # h_n
        jax.ShapeDtypeStruct((Bp, Hp), out_dtype),      # c_n
    )

    grid_spec = pltpu.PrefetchScalarGridSpec(
        num_scalar_prefetch=0,
        grid=(n_bblk, n_tblk),                          # time axis last (sequential)
        in_specs=[
            pl.BlockSpec((TB, tb, I), lambda bb, tk: (tk, bb, 0)),   # x time block
            pl.BlockSpec((I, G), lambda bb, tk: (0, 0)),             # W_ih^T (resident)
            pl.BlockSpec((Hp, G), lambda bb, tk: (0, 0)),            # W_hh^T (resident)
            pl.BlockSpec((1, G), lambda bb, tk: (0, 0)),             # fused bias
            pl.BlockSpec((tb, Hp), lambda bb, tk: (bb, 0)),          # h0
            pl.BlockSpec((tb, Hp), lambda bb, tk: (bb, 0)),          # c0
        ],
        out_specs=[
            pl.BlockSpec((TB, tb, Hp), lambda bb, tk: (tk, bb, 0)),  # output slab
            pl.BlockSpec((tb, Hp), lambda bb, tk: (bb, 0)),          # h_n (resident)
            pl.BlockSpec((tb, Hp), lambda bb, tk: (bb, 0)),          # c_n (resident)
        ],
        scratch_shapes=[
            pltpu.VMEM((tb, Hp), jnp.float32),   # h carry
            pltpu.VMEM((tb, Hp), jnp.float32),   # c carry
        ],
    )

    out, h_n, c_n = pl.pallas_call(
        kernel,
        out_shape=out_shapes,
        grid_spec=grid_spec,
        compiler_params=pltpu.CompilerParams(
            # batch blocks are independent (megacore on v7x); time is sequential
            dimension_semantics=("parallel", "arbitrary"),
            # explicit VMEM budget (v5e/v6e scoped defaults are 16/32 MiB);
            # 64 MiB also fits v7x's physical cap.
            vmem_limit_bytes=64 * 1024 * 1024,
        ),
    )(x_p, wih_t, whh_t, bias, h0_p, c0_p)

    return out[:, :B, :H], (h_n[:B, :H], c_n[:B, :H])


def init_rnnbase_params(key, input_size, hidden_size, num_layers=1):
    """Matches RNNBase.__init__/reset_parameters: uniform(-stdv, stdv),
    stdv = 1/sqrt(hidden_size); unidirectional, bias=True."""
    stdv = 1.0 / math.sqrt(hidden_size)
    gate_size = 4 * hidden_size
    params = []
    for layer in range(num_layers):
        layer_input = input_size if layer == 0 else hidden_size
        key, k1, k2, k3, k4 = jax.random.split(key, 5)
        w_ih = jax.random.uniform(k1, (gate_size, layer_input), jnp.float32, -stdv, stdv)
        w_hh = jax.random.uniform(k2, (gate_size, hidden_size), jnp.float32, -stdv, stdv)
        b_ih = jax.random.uniform(k3, (gate_size,), jnp.float32, -stdv, stdv)
        b_hh = jax.random.uniform(k4, (gate_size,), jnp.float32, -stdv, stdv)
        params.append((w_ih, w_hh, b_ih, b_hh))
    return params


def rnnbase_forward(x, params, h0, c0, *, compute_dtype=jnp.float32, time_block=16):
    """Multi-layer unidirectional LSTM forward. x: (T, B, I)."""
    # TODO(synk): bidirectional=True, inter-layer dropout and PackedSequence
    #             (batch_sizes) inputs are not implemented.
    # TODO(synk): layers run as separate pallas_calls; a fused wavefront kernel
    #             could overlap the next layer's weight DMA / use the 2nd TC.
    layer_in = x
    h_ns, c_ns = [], []
    for layer, (w_ih, w_hh, b_ih, b_hh) in enumerate(params):
        layer_out, (h_n, c_n) = lstm_layer_pallas(
            layer_in, w_ih, w_hh, b_ih, b_hh, h0[layer], c0[layer],
            time_block=time_block, compute_dtype=compute_dtype,
            out_dtype=x.dtype)
        h_ns.append(h_n)
        c_ns.append(c_n)
        layer_in = layer_out
    return layer_in, (jnp.stack(h_ns, 0), jnp.stack(c_ns, 0))


def _lstm_reference(x, params, h0, c0, compute_dtype=jnp.float32):
    """Pure-JAX reference (lax.scan), with the same optional weight/activation
    cast so the bf16 path can be checked tightly."""
    def one_layer(xseq, w_ih, w_hh, b_ih, b_hh, h_init, c_init):
        H = h_init.shape[-1]
        w_ih_c = w_ih.astype(compute_dtype)
        w_hh_c = w_hh.astype(compute_dtype)
        b = (b_ih + b_hh).astype(jnp.float32)

        def step(carry, x_t):
            h, c = carry
            gates = (jnp.dot(x_t.astype(compute_dtype), w_ih_c.T,
                             preferred_element_type=jnp.float32)
                     + jnp.dot(h.astype(compute_dtype), w_hh_c.T,
                               preferred_element_type=jnp.float32)
                     + b)
            i = jax.nn.sigmoid(gates[:, 0 * H:1 * H])
            f = jax.nn.sigmoid(gates[:, 1 * H:2 * H])
            g = jnp.tanh(gates[:, 2 * H:3 * H])
            o = jax.nn.sigmoid(gates[:, 3 * H:4 * H])
            c_new = f * c + i * g
            h_new = o * jnp.tanh(c_new)
            return (h_new, c_new), h_new

        (h_n, c_n), ys = jax.lax.scan(step, (h_init, c_init), xseq)
        return ys, h_n, c_n

    layer_in = x
    h_ns, c_ns = [], []
    for layer, (w_ih, w_hh, b_ih, b_hh) in enumerate(params):
        layer_in, h_n, c_n = one_layer(layer_in, w_ih, w_hh, b_ih, b_hh,
                                       h0[layer], c0[layer])
        h_ns.append(h_n)
        c_ns.append(c_n)
    return layer_in, (jnp.stack(h_ns, 0), jnp.stack(c_ns, 0))


if __name__ == "__main__":
    # Small, TPU-friendly shapes (hidden is padded to 128 lanes internally).
    T, B, I, H = 8, 8, 32, 32
    num_layers = 2

    key = jax.random.PRNGKey(0)
    kx, kh, kc, kp = jax.random.split(key, 4)

    x = jax.random.normal(kx, (T, B, I), jnp.float32)
    h0 = jax.random.normal(kh, (num_layers, B, H), jnp.float32)
    c0 = jax.random.normal(kc, (num_layers, B, H), jnp.float32)
    params = init_rnnbase_params(kp, I, H, num_layers)

    # ---- float32 path: tight semantic check vs pure-JAX reference ----
    out32, (hn32, cn32) = rnnbase_forward(x, params, h0, c0,
                                          compute_dtype=jnp.float32)
    out32 = jax.block_until_ready(out32)
    hn32 = jax.block_until_ready(hn32)
    cn32 = jax.block_until_ready(cn32)
    ref32, (rhn32, rcn32) = _lstm_reference(x, params, h0, c0, jnp.float32)

    assert out32.shape == (T, B, H)
    assert hn32.shape == (num_layers, B, H) and cn32.shape == (num_layers, B, H)
    assert jnp.allclose(out32, ref32, atol=1e-4, rtol=1e-4), "f32 output mismatch"
    assert jnp.allclose(hn32, rhn32, atol=1e-4, rtol=1e-4), "f32 h_n mismatch"
    assert jnp.allclose(cn32, rcn32, atol=1e-4, rtol=1e-4), "f32 c_n mismatch"

    # ---- bfloat16-weight path (f32 state/accumulation) vs same-cast reference ----
    out16, (hn16, cn16) = rnnbase_forward(x, params, h0, c0,
                                          compute_dtype=jnp.bfloat16)
    out16 = jax.block_until_ready(out16)
    ref16, (rhn16, _) = _lstm_reference(x, params, h0, c0, jnp.bfloat16)
    assert jnp.allclose(out16, ref16, atol=2e-2, rtol=2e-2), "bf16 output mismatch"
    assert jnp.allclose(hn16, rhn16, atol=2e-2, rtol=2e-2), "bf16 h_n mismatch"

    print("KERNEL_OK")
</pallas_src>

<mosaic_0001>
module attributes {stable_mosaic.version = 11 : i64} {
  func.func @_lstm_block_kernel(%arg0: i32, %arg1: i32, %arg2: memref<8x8x32xf32, #tpu.memory_space<vmem>>, %arg3: memref<32x512xf32, #tpu.memory_space<vmem>>, %arg4: memref<128x512xf32, #tpu.memory_space<vmem>>, %arg5: memref<1x512xf32, #tpu.memory_space<vmem>>, %arg6: memref<8x128xf32, #tpu.memory_space<vmem>>, %arg7: memref<8x128xf32, #tpu.memory_space<vmem>>, %arg8: memref<8x8x128xf32, #tpu.memory_space<vmem>>, %arg9: memref<8x128xf32, #tpu.memory_space<vmem>>, %arg10: memref<8x128xf32, #tpu.memory_space<vmem>>, %arg11: memref<8x128xf32, #tpu.memory_space<vmem>>, %arg12: memref<8x128xf32, #tpu.memory_space<vmem>>) attributes {dimension_semantics = [#tpu.dimension_semantics<parallel>, #tpu.dimension_semantics<arbitrary>], iteration_bounds = array<i64: 1, 1>, scalar_prefetch = 0 : i64, scratch_operands = 2 : i64, tpu.core_type = #tpu.core_type<tc>, window_params = [{transform_indices = @transform_0, window_bounds = array<i64: 8, 8, 32>}, {pipeline_mode = #tpu.pipeline_mode<synchronous>, transform_indices = @transform_1, window_bounds = array<i64: 32, 512>}, {pipeline_mode = #tpu.pipeline_mode<synchronous>, transform_indices = @transform_2, window_bounds = array<i64: 128, 512>}, {pipeline_mode = #tpu.pipeline_mode<synchronous>, transform_indices = @transform_3, window_bounds = array<i64: 1, 512>}, {transform_indices = @transform_4, window_bounds = array<i64: 8, 128>}, {transform_indices = @transform_5, window_bounds = array<i64: 8, 128>}, {transform_indices = @transform_6, window_bounds = array<i64: 8, 8, 128>}, {transform_indices = @transform_7, window_bounds = array<i64: 8, 128>}, {transform_indices = @transform_8, window_bounds = array<i64: 8, 128>}]} {
    %c0_i32 = arith.constant 0 : i32
    %0 = arith.cmpi eq, %arg1, %c0_i32 : i32
    %1 = arith.extui %0 : i1 to i32
    %c0_i32_0 = arith.constant 0 : i32
    %2 = arith.cmpi ne, %1, %c0_i32_0 : i32
    scf.if %2 {
      %c0_68 = arith.constant 0 : index
      %c0_69 = arith.constant 0 : index
      %266 = vector.load %arg6[%c0_68, %c0_69] : memref<8x128xf32, #tpu.memory_space<vmem>>, vector<8x128xf32>
      %c0_70 = arith.constant 0 : index
      %c0_71 = arith.constant 0 : index
      %267 = vector.load %arg11[%c0_70, %c0_71] : memref<8x128xf32, #tpu.memory_space<vmem>>, vector<8x128xf32>
      tpu.vector_store %arg11[%c0_70, %c0_71], %266 {strides = array<i32>} : memref<8x128xf32, #tpu.memory_space<vmem>>, vector<8x128xf32>,
      %c0_72 = arith.constant 0 : index
      %c0_73 = arith.constant 0 : index
      %268 = vector.load %arg7[%c0_72, %c0_73] : memref<8x128xf32, #tpu.memory_space<vmem>>, vector<8x128xf32>
      %c0_74 = arith.constant 0 : index
      %c0_75 = arith.constant 0 : index
      %269 = vector.load %arg12[%c0_74, %c0_75] : memref<8x128xf32, #tpu.memory_space<vmem>>, vector<8x128xf32>
      tpu.vector_store %arg12[%c0_74, %c0_75], %268 {strides = array<i32>} : memref<8x128xf32, #tpu.memory_space<vmem>>, vector<8x128xf32>,
    } else {
    }
    %c0 = arith.constant 0 : index
    %c0_1 = arith.constant 0 : index
    %c0_2 = arith.constant 0 : index
    %3 = vector.load %arg2[%c0, %c0_1, %c0_2] : memref<8x8x32xf32, #tpu.memory_space<vmem>>, vector<8x8x32xf32>
    %4 = vector.shape_cast %3 : vector<8x8x32xf32> to vector<64x32xf32>
    %c0_3 = arith.constant 0 : index
    %c0_4 = arith.constant 0 : index
    %5 = vector.load %arg3[%c0_3, %c0_4] : memref<32x512xf32, #tpu.memory_space<vmem>>, vector<32x512xf32>
    %cst = arith.constant dense<0.000000e+00> : vector<64x512xf32>
    %6 = tpu.matmul %4, %5, %cst {dimension_numbers = #tpu.dot_dimension_numbers<[1], [0], [0], [1], [0, 0, 1, 1], [], []>} : vector<64x32xf32>, vector<32x512xf32>, vector<64x512xf32> -> vector<64x512xf32>
    %c0_5 = arith.constant 0 : index
    %c0_6 = arith.constant 0 : index
    %7 = vector.load %arg5[%c0_5, %c0_6] : memref<1x512xf32, #tpu.memory_space<vmem>>, vector<1x512xf32>
    %8 = vector.broadcast %7 : vector<1x512xf32> to vector<64x512xf32>
    %9 = arith.addf %6, %8 : vector<64x512xf32>
    %c0_7 = arith.constant 0 : index
    %c0_8 = arith.constant 0 : index
    %10 = vector.load %arg11[%c0_7, %c0_8] : memref<8x128xf32, #tpu.memory_space<vmem>>, vector<8x128xf32>
    %c0_9 = arith.constant 0 : index
    %c0_10 = arith.constant 0 : index
    %11 = vector.load %arg12[%c0_9, %c0_10] : memref<8x128xf32, #tpu.memory_space<vmem>>, vector<8x128xf32>
    %c0_11 = arith.constant 0 : index
    %c0_12 = arith.constant 0 : index
    %12 = vector.load %arg4[%c0_11, %c0_12] : memref<128x512xf32, #tpu.memory_space<vmem>>, vector<128x512xf32>
    %13 = vector.extract_strided_slice %9 {offsets = [0, 0], sizes = [8, 512], strides = [1, 1]} : vector<64x512xf32> to vector<8x512xf32>
    %cst_13 = arith.constant dense<0.000000e+00> : vector<8x512xf32>
    %14 = tpu.matmul %10, %12, %cst_13 {dimension_numbers = #tpu.dot_dimension_numbers<[1], [0], [0], [1], [0, 0, 1, 1], [], []>} : vector<8x128xf32>, vector<128x512xf32>, vector<8x512xf32> -> vector<8x512xf32>
    %15 = arith.addf %13, %14 : vector<8x512xf32>
    %16 = vector.extract_strided_slice %15 {offsets = [0, 0], sizes = [8, 128], strides = [1, 1]} : vector<8x512xf32> to vector<8x128xf32>
    %17 = arith.negf %16 : vector<8x128xf32>
    %18 = math.exp %17 : vector<8x128xf32>
    %cst_14 = arith.constant 1.000000e+00 : f32
    %19 = vector.broadcast %cst_14 : f32 to vector<8x128xf32>
    %20 = arith.addf %19, %18 : vector<8x128xf32>
    %21 = arith.divf %19, %20 : vector<8x128xf32>
    %22 = vector.extract_strided_slice %15 {offsets = [0, 128], sizes = [8, 128], strides = [1, 1]} : vector<8x512xf32> to vector<8x128xf32>
    %23 = arith.negf %22 : vector<8x128xf32>
    %24 = math.exp %23 : vector<8x128xf32>
    %cst_15 = arith.constant 1.000000e+00 : f32
    %25 = vector.broadcast %cst_15 : f32 to vector<8x128xf32>
    %26 = arith.addf %25, %24 : vector<8x128xf32>
    %27 = arith.divf %25, %26 : vector<8x128xf32>
    %28 = vector.extract_strided_slice %15 {offsets = [0, 256], sizes = [8, 128], strides = [1, 1]} : vector<8x512xf32> to vector<8x128xf32>
    %29 = math.tanh %28 : vector<8x128xf32>
    %30 = vector.extract_strided_slice %15 {offsets = [0, 384], sizes = [8, 128], strides = [1, 1]} : vector<8x512xf32> to vector<8x128xf32>
    %31 = arith.negf %30 : vector<8x128xf32>
    %32 = math.exp %31 : vector<8x128xf32>
    %cst_16 = arith.constant 1.000000e+00 : f32
    %33 = vector.broadcast %cst_16 : f32 to vector<8x128xf32>
    %34 = arith.addf %33, %32 : vector<8x128xf32>
    %35 = arith.divf %33, %34 : vector<8x128xf32>
    %36 = arith.mulf %27, %11 : vector<8x128xf32>
    %37 = arith.mulf %21, %29 : vector<8x128xf32>
    %38 = arith.addf %36, %37 : vector<8x128xf32>
    %39 = math.tanh %38 : vector<8x128xf32>
    %40 = arith.mulf %35, %39 : vector<8x128xf32>
    %c0_17 = arith.constant 0 : index
    %c0_18 = arith.constant 0 : index
    %c0_19 = arith.constant 0 : index
    %41 = vector.load %arg8[%c0_17, %c0_18, %c0_19] : memref<8x8x128xf32, #tpu.memory_space<vmem>>, vector<1x8x128xf32>
    %42 = vector.shape_cast %41 : vector<1x8x128xf32> to vector<8x128xf32>
    %43 = vector.shape_cast %40 : vector<8x128xf32> to vector<1x8x128xf32>
    tpu.vector_store %arg8[%c0_17, %c0_18, %c0_19], %43 {strides = array<i32>} : memref<8x8x128xf32, #tpu.memory_space<vmem>>, vector<1x8x128xf32>,
    %44 = vector.extract_strided_slice %9 {offsets = [8, 0], sizes = [8, 512], strides = [1, 1]} : vector<64x512xf32> to vector<8x512xf32>
    %cst_20 = arith.constant dense<0.000000e+00> : vector<8x512xf32>
    %45 = tpu.matmul %40, %12, %cst_20 {dimension_numbers = #tpu.dot_dimension_numbers<[1], [0], [0], [1], [0, 0, 1, 1], [], []>} : vector<8x128xf32>, vector<128x512xf32>, vector<8x512xf32> -> vector<8x512xf32>
    %46 = arith.addf %44, %45 : vector<8x512xf32>
    %47 = vector.extract_strided_slice %46 {offsets = [0, 0], sizes = [8, 128], strides = [1, 1]} : vector<8x512xf32> to vector<8x128xf32>
    %48 = arith.negf %47 : vector<8x128xf32>
    %49 = math.exp %48 : vector<8x128xf32>
    %cst_21 = arith.constant 1.000000e+00 : f32
    %50 = vector.broadcast %cst_21 : f32 to vector<8x128xf32>
    %51 = arith.addf %50, %49 : vector<8x128xf32>
    %52 = arith.divf %50, %51 : vector<8x128xf32>
    %53 = vector.extract_strided_slice %46 {offsets = [0, 128], sizes = [8, 128], strides = [1, 1]} : vector<8x512xf32> to vector<8x128xf32>
    %54 = arith.negf %53 : vector<8x128xf32>
    %55 = math.exp %54 : vector<8x128xf32>
    %cst_22 = arith.constant 1.000000e+00 : f32
    %56 = vector.broadcast %cst_22 : f32 to vector<8x128xf32>
    %57 = arith.addf %56, %55 : vector<8x128xf32>
    %58 = arith.divf %56, %57 : vector<8x128xf32>
    %59 = vector.extract_strided_slice %46 {offsets = [0, 256], sizes = [8, 128], strides = [1, 1]} : vector<8x512xf32> to vector<8x128xf32>
    %60 = math.tanh %59 : vector<8x128xf32>
    %61 = vector.extract_strided_slice %46 {offsets = [0, 384], sizes = [8, 128], strides = [1, 1]} : vector<8x512xf32> to vector<8x128xf32>
    %62 = arith.negf %61 : vector<8x128xf32>
    %63 = math.exp %62 : vector<8x128xf32>
    %cst_23 = arith.constant 1.000000e+00 : f32
    %64 = vector.broadcast %cst_23 : f32 to vector<8x128xf32>
    %65 = arith.addf %64, %63 : vector<8x128xf32>
    %66 = arith.divf %64, %65 : vector<8x128xf32>
    %67 = arith.mulf %58, %38 : vector<8x128xf32>
    %68 = arith.mulf %52, %60 : vector<8x128xf32>
    %69 = arith.addf %67, %68 : vector<8x128xf32>
    %70 = math.tanh %69 : vector<8x128xf32>
    %71 = arith.mulf %66, %70 : vector<8x128xf32>
    %c1 = arith.constant 1 : index
    %c0_24 = arith.constant 0 : index
    %c0_25 = arith.constant 0 : index
    %72 = vector.load %arg8[%c1, %c0_24, %c0_25] : memref<8x8x128xf32, #tpu.memory_space<vmem>>, vector<1x8x128xf32>
    %73 = vector.shape_cast %72 : vector<1x8x128xf32> to vector<8x128xf32>
    %74 = vector.shape_cast %71 : vector<8x128xf32> to vector<1x8x128xf32>
    tpu.vector_store %arg8[%c1, %c0_24, %c0_25], %74 {strides = array<i32>} : memref<8x8x128xf32, #tpu.memory_space<vmem>>, vector<1x8x128xf32>,
    %75 = vector.extract_strided_slice %9 {offsets = [16, 0], sizes = [8, 512], strides = [1, 1]} : vector<64x512xf32> to vector<8x512xf32>
    %cst_26 = arith.constant dense<0.000000e+00> : vector<8x512xf32>
    %76 = tpu.matmul %71, %12, %cst_26 {dimension_numbers = #tpu.dot_dimension_numbers<[1], [0], [0], [1], [0, 0, 1, 1], [], []>} : vector<8x128xf32>, vector<128x512xf32>, vector<8x512xf32> -> vector<8x512xf32>
    %77 = arith.addf %75, %76 : vector<8x512xf32>
    %78 = vector.extract_strided_slice %77 {offsets = [0, 0], sizes = [8, 128], strides = [1, 1]} : vector<8x512xf32> to vector<8x128xf32>
    %79 = arith.negf %78 : vector<8x128xf32>
    %80 = math.exp %79 : vector<8x128xf32>
    %cst_27 = arith.constant 1.000000e+00 : f32
    %81 = vector.broadcast %cst_27 : f32 to vector<8x128xf32>
    %82 = arith.addf %81, %80 : vector<8x128xf32>
    %83 = arith.divf %81, %82 : vector<8x128xf32>
    %84 = vector.extract_strided_slice %77 {offsets = [0, 128], sizes = [8, 128], strides = [1, 1]} : vector<8x512xf32> to vector<8x128xf32>
    %85 = arith.negf %84 : vector<8x128xf32>
    %86 = math.exp %85 : vector<8x128xf32>
    %cst_28 = arith.constant 1.000000e+00 : f32
    %87 = vector.broadcast %cst_28 : f32 to vector<8x128xf32>
    %88 = arith.addf %87, %86 : vector<8x128xf32>
    %89 = arith.divf %87, %88 : vector<8x128xf32>
    %90 = vector.extract_strided_slice %77 {offsets = [0, 256], sizes = [8, 128], strides = [1, 1]} : vector<8x512xf32> to vector<8x128xf32>
    %91 = math.tanh %90 : vector<8x128xf32>
    %92 = vector.extract_strided_slice %77 {offsets = [0, 384], sizes = [8, 128], strides = [1, 1]} : vector<8x512xf32> to vector<8x128xf32>
    %93 = arith.negf %92 : vector<8x128xf32>
    %94 = math.exp %93 : vector<8x128xf32>
    %cst_29 = arith.constant 1.000000e+00 : f32
    %95 = vector.broadcast %cst_29 : f32 to vector<8x128xf32>
    %96 = arith.addf %95, %94 : vector<8x128xf32>
    %97 = arith.divf %95, %96 : vector<8x128xf32>
    %98 = arith.mulf %89, %69 : vector<8x128xf32>
    %99 = arith.mulf %83, %91 : vector<8x128xf32>
    %100 = arith.addf %98, %99 : vector<8x128xf32>
    %101 = math.tanh %100 : vector<8x128xf32>
    %102 = arith.mulf %97, %101 : vector<8x128xf32>
    %c2 = arith.constant 2 : index
    %c0_30 = arith.constant 0 : index
    %c0_31 = arith.constant 0 : index
    %103 = vector.load %arg8[%c2, %c0_30, %c0_31] : memref<8x8x128xf32, #tpu.memory_space<vmem>>, vector<1x8x128xf32>
    %104 = vector.shape_cast %103 : vector<1x8x128xf32> to vector<8x128xf32>
    %105 = vector.shape_cast %102 : vector<8x128xf32> to vector<1x8x128xf32>
    tpu.vector_store %arg8[%c2, %c0_30, %c0_31], %105 {strides = array<i32>} : memref<8x8x128xf32, #tpu.memory_space<vmem>>, vector<1x8x128xf32>,
    %106 = vector.extract_strided_slice %9 {offsets = [24, 0], sizes = [8, 512], strides = [1, 1]} : vector<64x512xf32> to vector<8x512xf32>
    %cst_32 = arith.constant dense<0.000000e+00> : vector<8x512xf32>
    %107 = tpu.matmul %102, %12, %cst_32 {dimension_numbers = #tpu.dot_dimension_numbers<[1], [0], [0], [1], [0, 0, 1, 1], [], []>} : vector<8x128xf32>, vector<128x512xf32>, vector<8x512xf32> -> vector<8x512xf32>
    %108 = arith.addf %106, %107 : vector<8x512xf32>
    %109 = vector.extract_strided_slice %108 {offsets = [0, 0], sizes = [8, 128], strides = [1, 1]} : vector<8x512xf32> to vector<8x128xf32>
    %110 = arith.negf %109 : vector<8x128xf32>
    %111 = math.exp %110 : vector<8x128xf32>
    %cst_33 = arith.constant 1.000000e+00 : f32
    %112 = vector.broadcast %cst_33 : f32 to vector<8x128xf32>
    %113 = arith.addf %112, %111 : vector<8x128xf32>
    %114 = arith.divf %112, %113 : vector<8x128xf32>
    %115 = vector.extract_strided_slice %108 {offsets = [0, 128], sizes = [8, 128], strides = [1, 1]} : vector<8x512xf32> to vector<8x128xf32>
    %116 = arith.negf %115 : vector<8x128xf32>
    %117 = math.exp %116 : vector<8x128xf32>
    %cst_34 = arith.constant 1.000000e+00 : f32
    %118 = vector.broadcast %cst_34 : f32 to vector<8x128xf32>
    %119 = arith.addf %118, %117 : vector<8x128xf32>
    %120 = arith.divf %118, %119 : vector<8x128xf32>
    %121 = vector.extract_strided_slice %108 {offsets = [0, 256], sizes = [8, 128], strides = [1, 1]} : vector<8x512xf32> to vector<8x128xf32>
    %122 = math.tanh %121 : vector<8x128xf32>
    %123 = vector.extract_strided_slice %108 {offsets = [0, 384], sizes = [8, 128], strides = [1, 1]} : vector<8x512xf32> to vector<8x128xf32>
    %124 = arith.negf %123 : vector<8x128xf32>
    %125 = math.exp %124 : vector<8x128xf32>
    %cst_35 = arith.constant 1.000000e+00 : f32
    %126 = vector.broadcast %cst_35 : f32 to vector<8x128xf32>
    %127 = arith.addf %126, %125 : vector<8x128xf32>
    %128 = arith.divf %126, %127 : vector<8x128xf32>
    %129 = arith.mulf %120, %100 : vector<8x128xf32>
    %130 = arith.mulf %114, %122 : vector<8x128xf32>
    %131 = arith.addf %129, %130 : vector<8x128xf32>
    %132 = math.tanh %131 : vector<8x128xf32>
    %133 = arith.mulf %128, %132 : vector<8x128xf32>
    %c3 = arith.constant 3 : index
    %c0_36 = arith.constant 0 : index
    %c0_37 = arith.constant 0 : index
    %134 = vector.load %arg8[%c3, %c0_36, %c0_37] : memref<8x8x128xf32, #tpu.memory_space<vmem>>, vector<1x8x128xf32>
    %135 = vector.shape_cast %134 : vector<1x8x128xf32> to vector<8x128xf32>
    %136 = vector.shape_cast %133 : vector<8x128xf32> to vector<1x8x128xf32>
    tpu.vector_store %arg8[%c3, %c0_36, %c0_37], %136 {strides = array<i32>} : memref<8x8x128xf32, #tpu.memory_space<vmem>>, vector<1x8x128xf32>,
    %137 = vector.extract_strided_slice %9 {offsets = [32, 0], sizes = [8, 512], strides = [1, 1]} : vector<64x512xf32> to vector<8x512xf32>
    %cst_38 = arith.constant dense<0.000000e+00> : vector<8x512xf32>
    %138 = tpu.matmul %133, %12, %cst_38 {dimension_numbers = #tpu.dot_dimension_numbers<[1], [0], [0], [1], [0, 0, 1, 1], [], []>} : vector<8x128xf32>, vector<128x512xf32>, vector<8x512xf32> -> vector<8x512xf32>
    %139 = arith.addf %137, %138 : vector<8x512xf32>
    %140 = vector.extract_strided_slice %139 {offsets = [0, 0], sizes = [8, 128], strides = [1, 1]} : vector<8x512xf32> to vector<8x128xf32>
    %141 = arith.negf %140 : vector<8x128xf32>
    %142 = math.exp %141 : vector<8x128xf32>
    %cst_39 = arith.constant 1.000000e+00 : f32
    %143 = vector.broadcast %cst_39 : f32 to vector<8x128xf32>
    %144 = arith.addf %143, %142 : vector<8x128xf32>
    %145 = arith.divf %143, %144 : vector<8x128xf32>
    %146 = vector.extract_strided_slice %139 {offsets = [0, 128], sizes = [8, 128], strides = [1, 1]} : vector<8x512xf32> to vector<8x128xf32>
    %147 = arith.negf %146 : vector<8x128xf32>
    %148 = math.exp %147 : vector<8x128xf32>
    %cst_40 = arith.constant 1.000000e+00 : f32
    %149 = vector.broadcast %cst_40 : f32 to vector<8x128xf32>
    %150 = arith.addf %149, %148 : vector<8x128xf32>
    %151 = arith.divf %149, %150 : vector<8x128xf32>
    %152 = vector.extract_strided_slice %139 {offsets = [0, 256], sizes = [8, 128], strides = [1, 1]} : vector<8x512xf32> to vector<8x128xf32>
    %153 = math.tanh %152 : vector<8x128xf32>
    %154 = vector.extract_strided_slice %139 {offsets = [0, 384], sizes = [8, 128], strides = [1, 1]} : vector<8x512xf32> to vector<8x128xf32>
    %155 = arith.negf %154 : vector<8x128xf32>
    %156 = math.exp %155 : vector<8x128xf32>
    %cst_41 = arith.constant 1.000000e+00 : f32
    %157 = vector.broadcast %cst_41 : f32 to vector<8x128xf32>
    %158 = arith.addf %157, %156 : vector<8x128xf32>
    %159 = arith.divf %157, %158 : vector<8x128xf32>
    %160 = arith.mulf %151, %131 : vector<8x128xf32>
    %161 = arith.mulf %145, %153 : vector<8x128xf32>
    %162 = arith.addf %160, %161 : vector<8x128xf32>
    %163 = math.tanh %162 : vector<8x128xf32>
    %164 = arith.mulf %159, %163 : vector<8x128xf32>
    %c4 = arith.constant 4 : index
    %c0_42 = arith.constant 0 : index
    %c0_43 = arith.constant 0 : index
    %165 = vector.load %arg8[%c4, %c0_42, %c0_43] : memref<8x8x128xf32, #tpu.memory_space<vmem>>, vector<1x8x128xf32>
    %166 = vector.shape_cast %165 : vector<1x8x128xf32> to vector<8x128xf32>
    %167 = vector.shape_cast %164 : vector<8x128xf32> to vector<1x8x128xf32>
    tpu.vector_store %arg8[%c4, %c0_42, %c0_43], %167 {strides = array<i32>} : memref<8x8x128xf32, #tpu.memory_space<vmem>>, vector<1x8x128xf32>,
    %168 = vector.extract_strided_slice %9 {offsets = [40, 0], sizes = [8, 512], strides = [1, 1]} : vector<64x512xf32> to vector<8x512xf32>
    %cst_44 = arith.constant dense<0.000000e+00> : vector<8x512xf32>
    %169 = tpu.matmul %164, %12, %cst_44 {dimension_numbers = #tpu.dot_dimension_numbers<[1], [0], [0], [1], [0, 0, 1, 1], [], []>} : vector<8x128xf32>, vector<128x512xf32>, vector<8x512xf32> -> vector<8x512xf32>
    %170 = arith.addf %168, %169 : vector<8x512xf32>
    %171 = vector.extract_strided_slice %170 {offsets = [0, 0], sizes = [8, 128], strides = [1, 1]} : vector<8x512xf32> to vector<8x128xf32>
    %172 = arith.negf %171 : vector<8x128xf32>
    %173 = math.exp %172 : vector<8x128xf32>
    %cst_45 = arith.constant 1.000000e+00 : f32
    %174 = vector.broadcast %cst_45 : f32 to vector<8x128xf32>
    %175 = arith.addf %174, %173 : vector<8x128xf32>
    %176 = arith.divf %174, %175 : vector<8x128xf32>
    %177 = vector.extract_strided_slice %170 {offsets = [0, 128], sizes = [8, 128], strides = [1, 1]} : vector<8x512xf32> to vector<8x128xf32>
    %178 = arith.negf %177 : vector<8x128xf32>
    %179 = math.exp %178 : vector<8x128xf32>
    %cst_46 = arith.constant 1.000000e+00 : f32
    %180 = vector.broadcast %cst_46 : f32 to vector<8x128xf32>
    %181 = arith.addf %180, %179 : vector<8x128xf32>
    %182 = arith.divf %180, %181 : vector<8x128xf32>
    %183 = vector.extract_strided_slice %170 {offsets = [0, 256], sizes = [8, 128], strides = [1, 1]} : vector<8x512xf32> to vector<8x128xf32>
    %184 = math.tanh %183 : vector<8x128xf32>
    %185 = vector.extract_strided_slice %170 {offsets = [0, 384], sizes = [8, 128], strides = [1, 1]} : vector<8x512xf32> to vector<8x128xf32>
    %186 = arith.negf %185 : vector<8x128xf32>
    %187 = math.exp %186 : vector<8x128xf32>
    %cst_47 = arith.constant 1.000000e+00 : f32
    %188 = vector.broadcast %cst_47 : f32 to vector<8x128xf32>
    %189 = arith.addf %188, %187 : vector<8x128xf32>
    %190 = arith.divf %188, %189 : vector<8x128xf32>
    %191 = arith.mulf %182, %162 : vector<8x128xf32>
    %192 = arith.mulf %176, %184 : vector<8x128xf32>
    %193 = arith.addf %191, %192 : vector<8x128xf32>
    %194 = math.tanh %193 : vector<8x128xf32>
    %195 = arith.mulf %190, %194 : vector<8x128xf32>
    %c5 = arith.constant 5 : index
    %c0_48 = arith.constant 0 : index
    %c0_49 = arith.constant 0 : index
    %196 = vector.load %arg8[%c5, %c0_48, %c0_49] : memref<8x8x128xf32, #tpu.memory_space<vmem>>, vector<1x8x128xf32>
    %197 = vector.shape_cast %196 : vector<1x8x128xf32> to vector<8x128xf32>
    %198 = vector.shape_cast %195 : vector<8x128xf32> to vector<1x8x128xf32>
    tpu.vector_store %arg8[%c5, %c0_48, %c0_49], %198 {strides = array<i32>} : memref<8x8x128xf32, #tpu.memory_space<vmem>>, vector<1x8x128xf32>,
    %199 = vector.extract_strided_slice %9 {offsets = [48, 0], sizes = [8, 512], strides = [1, 1]} : vector<64x512xf32> to vector<8x512xf32>
    %cst_50 = arith.constant dense<0.000000e+00> : vector<8x512xf32>
    %200 = tpu.matmul %195, %12, %cst_50 {dimension_numbers = #tpu.dot_dimension_numbers<[1], [0], [0], [1], [0, 0, 1, 1], [], []>} : vector<8x128xf32>, vector<128x512xf32>, vector<8x512xf32> -> vector<8x512xf32>
    %201 = arith.addf %199, %200 : vector<8x512xf32>
    %202 = vector.extract_strided_slice %201 {offsets = [0, 0], sizes = [8, 128], strides = [1, 1]} : vector<8x512xf32> to vector<8x128xf32>
    %203 = arith.negf %202 : vector<8x128xf32>
    %204 = math.exp %203 : vector<8x128xf32>
    %cst_51 = arith.constant 1.000000e+00 : f32
    %205 = vector.broadcast %cst_51 : f32 to vector<8x128xf32>
    %206 = arith.addf %205, %204 : vector<8x128xf32>
    %207 = arith.divf %205, %206 : vector<8x128xf32>
    %208 = vector.extract_strided_slice %201 {offsets = [0, 128], sizes = [8, 128], strides = [1, 1]} : vector<8x512xf32> to vector<8x128xf32>
    %209 = arith.negf %208 : vector<8x128xf32>
    %210 = math.exp %209 : vector<8x128xf32>
    %cst_52 = arith.constant 1.000000e+00 : f32
    %211 = vector.broadcast %cst_52 : f32 to vector<8x128xf32>
    %212 = arith.addf %211, %210 : vector<8x128xf32>
    %213 = arith.divf %211, %212 : vector<8x128xf32>
    %214 = vector.extract_strided_slice %201 {offsets = [0, 256], sizes = [8, 128], strides = [1, 1]} : vector<8x512xf32> to vector<8x128xf32>
    %215 = math.tanh %214 : vector<8x128xf32>
    %216 = vector.extract_strided_slice %201 {offsets = [0, 384], sizes = [8, 128], strides = [1, 1]} : vector<8x512xf32> to vector<8x128xf32>
    %217 = arith.negf %216 : vector<8x128xf32>
    %218 = math.exp %217 : vector<8x128xf32>
    %cst_53 = arith.constant 1.000000e+00 : f32
    %219 = vector.broadcast %cst_53 : f32 to vector<8x128xf32>
    %220 = arith.addf %219, %218 : vector<8x128xf32>
    %221 = arith.divf %219, %220 : vector<8x128xf32>
    %222 = arith.mulf %213, %193 : vector<8x128xf32>
    %223 = arith.mulf %207, %215 : vector<8x128xf32>
    %224 = arith.addf %222, %223 : vector<8x128xf32>
    %225 = math.tanh %224 : vector<8x128xf32>
    %226 = arith.mulf %221, %225 : vector<8x128xf32>
    %c6 = arith.constant 6 : index
    %c0_54 = arith.constant 0 : index
    %c0_55 = arith.constant 0 : index
    %227 = vector.load %arg8[%c6, %c0_54, %c0_55] : memref<8x8x128xf32, #tpu.memory_space<vmem>>, vector<1x8x128xf32>
    %228 = vector.shape_cast %227 : vector<1x8x128xf32> to vector<8x128xf32>
    %229 = vector.shape_cast %226 : vector<8x128xf32> to vector<1x8x128xf32>
    tpu.vector_store %arg8[%c6, %c0_54, %c0_55], %229 {strides = array<i32>} : memref<8x8x128xf32, #tpu.memory_space<vmem>>, vector<1x8x128xf32>,
    %230 = vector.extract_strided_slice %9 {offsets = [56, 0], sizes = [8, 512], strides = [1, 1]} : vector<64x512xf32> to vector<8x512xf32>
    %cst_56 = arith.constant dense<0.000000e+00> : vector<8x512xf32>
    %231 = tpu.matmul %226, %12, %cst_56 {dimension_numbers = #tpu.dot_dimension_numbers<[1], [0], [0], [1], [0, 0, 1, 1], [], []>} : vector<8x128xf32>, vector<128x512xf32>, vector<8x512xf32> -> vector<8x512xf32>
    %232 = arith.addf %230, %231 : vector<8x512xf32>
    %233 = vector.extract_strided_slice %232 {offsets = [0, 0], sizes = [8, 128], strides = [1, 1]} : vector<8x512xf32> to vector<8x128xf32>
    %234 = arith.negf %233 : vector<8x128xf32>
    %235 = math.exp %234 : vector<8x128xf32>
    %cst_57 = arith.constant 1.000000e+00 : f32
    %236 = vector.broadcast %cst_57 : f32 to vector<8x128xf32>
    %237 = arith.addf %236, %235 : vector<8x128xf32>
    %238 = arith.divf %236, %237 : vector<8x128xf32>
    %239 = vector.extract_strided_slice %232 {offsets = [0, 128], sizes = [8, 128], strides = [1, 1]} : vector<8x512xf32> to vector<8x128xf32>
    %240 = arith.negf %239 : vector<8x128xf32>
    %241 = math.exp %240 : vector<8x128xf32>
    %cst_58 = arith.constant 1.000000e+00 : f32
    %242 = vector.broadcast %cst_58 : f32 to vector<8x128xf32>
    %243 = arith.addf %242, %241 : vector<8x128xf32>
    %244 = arith.divf %242, %243 : vector<8x128xf32>
    %245 = vector.extract_strided_slice %232 {offsets = [0, 256], sizes = [8, 128], strides = [1, 1]} : vector<8x512xf32> to vector<8x128xf32>
    %246 = math.tanh %245 : vector<8x128xf32>
    %247 = vector.extract_strided_slice %232 {offsets = [0, 384], sizes = [8, 128], strides = [1, 1]} : vector<8x512xf32> to vector<8x128xf32>
    %248 = arith.negf %247 : vector<8x128xf32>
    %249 = math.exp %248 : vector<8x128xf32>
    %cst_59 = arith.constant 1.000000e+00 : f32
    %250 = vector.broadcast %cst_59 : f32 to vector<8x128xf32>
    %251 = arith.addf %250, %249 : vector<8x128xf32>
    %252 = arith.divf %250, %251 : vector<8x128xf32>
    %253 = arith.mulf %244, %224 : vector<8x128xf32>
    %254 = arith.mulf %238, %246 : vector<8x128xf32>
    %255 = arith.addf %253, %254 : vector<8x128xf32>
    %256 = math.tanh %255 : vector<8x128xf32>
    %257 = arith.mulf %252, %256 : vector<8x128xf32>
    %c7 = arith.constant 7 : index
    %c0_60 = arith.constant 0 : index
    %c0_61 = arith.constant 0 : index
    %258 = vector.load %arg8[%c7, %c0_60, %c0_61] : memref<8x8x128xf32, #tpu.memory_space<vmem>>, vector<1x8x128xf32>
    %259 = vector.shape_cast %258 : vector<1x8x128xf32> to vector<8x128xf32>
    %260 = vector.shape_cast %257 : vector<8x128xf32> to vector<1x8x128xf32>
    tpu.vector_store %arg8[%c7, %c0_60, %c0_61], %260 {strides = array<i32>} : memref<8x8x128xf32, #tpu.memory_space<vmem>>, vector<1x8x128xf32>,
    %c0_62 = arith.constant 0 : index
    %c0_63 = arith.constant 0 : index
    %261 = vector.load %arg11[%c0_62, %c0_63] : memref<8x128xf32, #tpu.memory_space<vmem>>, vector<8x128xf32>
    tpu.vector_store %arg11[%c0_62, %c0_63], %257 {strides = array<i32>} : memref<8x128xf32, #tpu.memory_space<vmem>>, vector<8x128xf32>,
    %c0_64 = arith.constant 0 : index
    %c0_65 = arith.constant 0 : index
    %262 = vector.load %arg12[%c0_64, %c0_65] : memref<8x128xf32, #tpu.memory_space<vmem>>, vector<8x128xf32>
    tpu.vector_store %arg12[%c0_64, %c0_65], %255 {strides = array<i32>} : memref<8x128xf32, #tpu.memory_space<vmem>>, vector<8x128xf32>,
    %c0_i32_66 = arith.constant 0 : i32
    %263 = arith.cmpi eq, %arg1, %c0_i32_66 : i32
    %264 = arith.extui %263 : i1 to i32
    %c0_i32_67 = arith.constant 0 : i32
    %265 = arith.cmpi ne, %264, %c0_i32_67 : i32
    scf.if %265 {
      %c0_68 = arith.constant 0 : index
      %c0_69 = arith.constant 0 : index
      %266 = vector.load %arg9[%c0_68, %c0_69] : memref<8x128xf32, #tpu.memory_space<vmem>>, vector<8x128xf32>
      tpu.vector_store %arg9[%c0_68, %c0_69], %257 {strides = array<i32>} : memref<8x128xf32, #tpu.memory_space<vmem>>, vector<8x128xf32>,
      %c0_70 = arith.constant 0 : index
      %c0_71 = arith.constant 0 : index
      %267 = vector.load %arg10[%c0_70, %c0_71] : memref<8x128xf32, #tpu.memory_space<vmem>>, vector<8x128xf32>
      tpu.vector_store %arg10[%c0_70, %c0_71], %255 {strides = array<i32>} : memref<8x128xf32, #tpu.memory_space<vmem>>, vector<8x128xf32>,
    } else {
    }
    return
  }
  func.func @transform_0(%arg0: i32, %arg1: i32) -> (i32, i32, i32) {
    %c0_i32 = arith.constant 0 : i32
    %c0_i32_0 = arith.constant 0 : i32
    return %arg1, %arg0, %c0_i32 : i32, i32, i32
  }
  func.func @transform_1(%arg0: i32, %arg1: i32) -> (i32, i32) {
    %c0_i32 = arith.constant 0 : i32
    %c0_i32_0 = arith.constant 0 : i32
    %c0_i32_1 = arith.constant 0 : i32
    return %c0_i32, %c0_i32_0 : i32, i32
  }
  func.func @transform_2(%arg0: i32, %arg1: i32) -> (i32, i32) {
    %c0_i32 = arith.constant 0 : i32
    %c0_i32_0 = arith.constant 0 : i32
    %c0_i32_1 = arith.constant 0 : i32
    return %c0_i32, %c0_i32_0 : i32, i32
  }
  func.func @transform_3(%arg0: i32, %arg1: i32) -> (i32, i32) {
    %c0_i32 = arith.constant 0 : i32
    %c0_i32_0 = arith.constant 0 : i32
    %c0_i32_1 = arith.constant 0 : i32
    return %c0_i32, %c0_i32_0 : i32, i32
  }
  func.func @transform_4(%arg0: i32, %arg1: i32) -> (i32, i32) {
    %c0_i32 = arith.constant 0 : i32
    %c0_i32_0 = arith.constant 0 : i32
    return %arg0, %c0_i32 : i32, i32
  }
  func.func @transform_5(%arg0: i32, %arg1: i32) -> (i32, i32) {
    %c0_i32 = arith.constant 0 : i32
    %c0_i32_0 = arith.constant 0 : i32
    return %arg0, %c0_i32 : i32, i32
  }
  func.func @transform_6(%arg0: i32, %arg1: i32) -> (i32, i32, i32) {
    %c0_i32 = arith.constant 0 : i32
    %c0_i32_0 = arith.constant 0 : i32
    return %arg1, %arg0, %c0_i32 : i32, i32, i32
  }
  func.func @transform_7(%arg0: i32, %arg1: i32) -> (i32, i32) {
    %c0_i32 = arith.constant 0 : i32
    %c0_i32_0 = arith.constant 0 : i32
    return %arg0, %c0_i32 : i32, i32
  }
  func.func @transform_8(%arg0: i32, %arg1: i32) -> (i32, i32) {
    %c0_i32 = arith.constant 0 : i32
    %c0_i32_0 = arith.constant 0 : i32
    return %arg0, %c0_i32 : i32, i32
  }
}

</mosaic_0001>

<llo_original>
// kernel: tpu_custom_call.1
$region0: #{tpu_custom_call.1}
  #allocation0 [shape = 'u32[]', space=smem, size = 0x4, offset = 0x4, fixed_abs, tag = 'smem constant byte address 0x4 - core index']
  #allocation1 [shape = 'u32[144,128]{1,0:T(1,128)}', space=vmem, size = 0x12000, scoped, tag = 'internal scratch']
  #allocation2 [shape = 'f32[8,128]{1,0:T(8,128)}', space=vmem, size = 0x1000, scoped, tag = 'scratch operand']
  #allocation3 [shape = 'f32[8,128]{1,0:T(8,128)}', space=vmem, size = 0x1000, scoped, tag = 'scratch operand']
  %s0 = inlined_call_operand.hbm [shape: f32[8,8,32], index: 0, kind: input, shape index: {}]
  %s1 = inlined_call_operand.hbm [shape: f32[32,512], index: 1, kind: input, shape index: {}]
  %s2 = inlined_call_operand.hbm [shape: f32[128,512], index: 2, kind: input, shape index: {}]
  %s3 = inlined_call_operand.hbm [shape: f32[1,512], index: 3, kind: input, shape index: {}]
  %s4 = inlined_call_operand.hbm [shape: f32[8,128], index: 4, kind: input, shape index: {}]
  %s5 = inlined_call_operand.hbm [shape: f32[8,128], index: 5, kind: input, shape index: {}]
  %s6 = inlined_call_operand.hbm [shape: f32[8,8,128], index: 6, kind: output, shape index: {0}]
  %s7 = inlined_call_operand.hbm [shape: f32[8,128], index: 7, kind: output, shape index: {1}]
  %s8 = inlined_call_operand.hbm [shape: f32[8,128], index: 8, kind: output, shape index: {2}]
  %9 = xla_tuple %s6, %s7, %s8
  %s10 = sld [smem:[#allocation0]]
  $region82: #{tpu_custom_call.1} parent=0
    _
  %s12 = ssub.s32 1, %s10
  %s13 = scalar_select 0, %s12, %s10
  $region1: #{tpu_custom_call.1} parent=0
    #allocation4 [shape = 'u8[32768]{0}', space=vmem, size = 0x8000, scoped, tag = 'input window, operand 0, single buffered']
    #allocation5 [shape = 's32[1]{0}', space=sflag, size = 0x4, scoped, tag = 'scoped memory for tpu_custom_call.1']
    #allocation6 [shape = 's32[1]{0}', space=sflag, size = 0x4, scoped, tag = 'scoped memory for tpu_custom_call.1']
    #allocation7 [shape = 'u8[65536]{0}', space=vmem, size = 0x10000, scoped, tag = 'input window, operand 1, single buffered']
    #allocation8 [shape = 's32[1]{0}', space=sflag, size = 0x4, scoped, tag = 'scoped memory for tpu_custom_call.1']
    #allocation9 [shape = 'u8[262144]{0}', space=vmem, size = 0x40000, scoped, tag = 'input window, operand 2, single buffered']
    #allocation10 [shape = 'u8[2048]{0}', space=vmem, size = 0x800, scoped, tag = 'input window, operand 3, single buffered']
    #allocation11 [shape = 's32[1]{0}', space=sflag, size = 0x4, scoped, tag = 'scoped memory for tpu_custom_call.1']
    #allocation12 [shape = 'u8[4096]{0}', space=vmem, size = 0x1000, scoped, tag = 'input window, operand 4, single buffered']
    #allocation13 [shape = 'u8[4096]{0}', space=vmem, size = 0x1000, scoped, tag = 'input window, operand 5, single buffered']
    #allocation14 [shape = 's32[1]{0}', space=sflag, size = 0x4, scoped, tag = 'scoped memory for tpu_custom_call.1']
    #allocation15 [shape = 'u8[32768]{0}', space=vmem, size = 0x8000, scoped, tag = 'output window, operand 0, single buffered']
    #allocation16 [shape = 'u8[4096]{0}', space=vmem, size = 0x1000, scoped, tag = 'output window, operand 1, single buffered']
    #allocation17 [shape = 's32[1]{0}', space=sflag, size = 0x4, scoped, tag = 'scoped memory for tpu_custom_call.1']
    #allocation18 [shape = 'u8[4096]{0}', space=vmem, size = 0x1000, scoped, tag = 'output window, operand 2, single buffered']
    %14 = vsyncpa [#allocation5], 0
    %15 = vsyncpa [#allocation8], 0
    %16 = vsyncpa [#allocation11], 0
    %17 = vsyncpa [#allocation14], 0
    %18 = vsyncpa [#allocation6], 0
    %19 = vsyncpa [#allocation17], 0
    // Predicated region
    $region2: #{tpu_custom_call.1} parent=1 // pred_check
      _
    $region3: #{tpu_custom_call.1} parent=1 // pred_check_branch
      %21 = sbr.rel (0) target = $region5
    $region4: #{tpu_custom_call.1} parent=1 // pred_region
      %s23 = ssub.s32 1024, 1024
      %24 = vsyncadd [#allocation5], %s23
      %s25 = sshll.u32 [#allocation4], 4
      %s26 = int_to_ptr.vmem [resolvable:$true] %s25
      %31 = dma.hbm_to_vmem [thread:$0]  %s0, 1024, %s26, [#allocation5], 128, 128, 8
    $region5: #{tpu_custom_call.1} parent=1 // pred_fallthru
      _
    // Predicated region
    $region6: #{tpu_custom_call.1} parent=1 // pred_check
      _
    $region7: #{tpu_custom_call.1} parent=1 // pred_check_branch
      %33 = sbr.rel (0) target = $region9
    $region8: #{tpu_custom_call.1} parent=1 // pred_region
      %s35 = ssub.s32 2048, 2048
      %36 = vsyncadd [#allocation8], %s35
      %s37 = sshll.u32 [#allocation7], 4
      %s38 = int_to_ptr.vmem [resolvable:$true] %s37
      %43 = dma.hbm_to_vmem [thread:$0]  %s1, 2048, %s38, [#allocation8], 512, 512, 32
    $region9: #{tpu_custom_call.1} parent=1 // pred_fallthru
      _
    // Predicated region
    $region10: #{tpu_custom_call.1} parent=1 // pred_check
      _
    $region11: #{tpu_custom_call.1} parent=1 // pred_check_branch
      %45 = sbr.rel (0) target = $region13
    $region12: #{tpu_custom_call.1} parent=1 // pred_region
      %s47 = ssub.s32 8192, 8192
      %48 = vsyncadd [#allocation8], %s47
      %s49 = sshll.u32 [#allocation9], 4
      %s50 = int_to_ptr.vmem [resolvable:$true] %s49
      %55 = dma.hbm_to_vmem [thread:$0]  %s2, 8192, %s50, [#allocation8], 512, 512, 32
    $region13: #{tpu_custom_call.1} parent=1 // pred_fallthru
      _
    // Predicated region
    $region14: #{tpu_custom_call.1} parent=1 // pred_check
      _
    $region15: #{tpu_custom_call.1} parent=1 // pred_check_branch
      %57 = sbr.rel (0) target = $region17
    $region16: #{tpu_custom_call.1} parent=1 // pred_region
      %s59 = ssub.s32 64, 64
      %60 = vsyncadd [#allocation11], %s59
      %s62 = sshll.u32 [#allocation10], 4
      %s63 = int_to_ptr.vmem [resolvable:$true] %s62
      %65 = dma.hbm_to_vmem [thread:$0]  %s3, 64, %s63, [#allocation11]
    $region17: #{tpu_custom_call.1} parent=1 // pred_fallthru
      _
    // Predicated region
    $region18: #{tpu_custom_call.1} parent=1 // pred_check
      _
    $region19: #{tpu_custom_call.1} parent=1 // pred_check_branch
      %67 = sbr.rel (0) target = $region21
    $region20: #{tpu_custom_call.1} parent=1 // pred_region
      %s69 = ssub.s32 128, 128
      %70 = vsyncadd [#allocation11], %s69
      %s72 = sshll.u32 [#allocation12], 4
      %s73 = int_to_ptr.vmem [resolvable:$true] %s72
      %75 = dma.hbm_to_vmem [thread:$0]  %s4, 128, %s73, [#allocation11]
    $region21: #{tpu_custom_call.1} parent=1 // pred_fallthru
      _
    // Predicated region
    $region22: #{tpu_custom_call.1} parent=1 // pred_check
      _
    $region23: #{tpu_custom_call.1} parent=1 // pred_check_branch
      %77 = sbr.rel (0) target = $region25
    $region24: #{tpu_custom_call.1} parent=1 // pred_region
      %s79 = ssub.s32 128, 128
      %80 = vsyncadd [#allocation14], %s79
      %s82 = sshll.u32 [#allocation13], 4
      %s83 = int_to_ptr.vmem [resolvable:$true] %s82
      %85 = dma.hbm_to_vmem [thread:$0]  %s5, 128, %s83, [#allocation14]
    $region25: #{tpu_custom_call.1} parent=1 // pred_fallthru
      _
    // Predicated region
    $region26: #{tpu_custom_call.1} parent=1 // pred_check
      _
    $region27: #{tpu_custom_call.1} parent=1 // pred_check_branch
      %87 = sbr.rel (0) target = $region29
    $region28: #{tpu_custom_call.1} parent=1 // pred_region
      %88 = dma.done [#allocation5], 1024
    $region29: #{tpu_custom_call.1} parent=1 // pred_fallthru
      _
    // Predicated region
    $region30: #{tpu_custom_call.1} parent=1 // pred_check
      _
    $region31: #{tpu_custom_call.1} parent=1 // pred_check_branch
      %90 = sbr.rel (0) target = $region33
    $region32: #{tpu_custom_call.1} parent=1 // pred_region
      %91 = dma.done [#allocation8], 2048
    $region33: #{tpu_custom_call.1} parent=1 // pred_fallthru
      _
    // Predicated region
    $region34: #{tpu_custom_call.1} parent=1 // pred_check
      _
    $region35: #{tpu_custom_call.1} parent=1 // pred_check_branch
      %93 = sbr.rel (0) target = $region37
    $region36: #{tpu_custom_call.1} parent=1 // pred_region
      %94 = dma.done [#allocation8], 8192
    $region37: #{tpu_custom_call.1} parent=1 // pred_fallthru
      _
    // Predicated region
    $region38: #{tpu_custom_call.1} parent=1 // pred_check
      _
    $region39: #{tpu_custom_call.1} parent=1 // pred_check_branch
      %96 = sbr.rel (0) target = $region41
    $region40: #{tpu_custom_call.1} parent=1 // pred_region
      %97 = dma.done [#allocation11], 64
    $region41: #{tpu_custom_call.1} parent=1 // pred_fallthru
      _
    // Predicated region
    $region42: #{tpu_custom_call.1} parent=1 // pred_check
      _
    $region43: #{tpu_custom_call.1} parent=1 // pred_check_branch
      %99 = sbr.rel (0) target = $region45
    $region44: #{tpu_custom_call.1} parent=1 // pred_region
      %100 = dma.done [#allocation11], 128
    $region45: #{tpu_custom_call.1} parent=1 // pred_fallthru
      _
    // Predicated region
    $region46: #{tpu_custom_call.1} parent=1 // pred_check
      _
    $region47: #{tpu_custom_call.1} parent=1 // pred_check_branch
      %102 = sbr.rel (0) target = $region49
    $region48: #{tpu_custom_call.1} parent=1 // pred_region
      %103 = dma.done [#allocation14], 128
    $region49: #{tpu_custom_call.1} parent=1 // pred_fallthru
      _
    %p104 = scmp.eq.s32.totalorder 0, 0
    // Predicated region
    $region50: #{tpu_custom_call.1} parent=1 // pred_check
      %p105 = pneg %p104
    $region51: #{tpu_custom_call.1} parent=1 // pred_check_branch
      %107 = sbr.rel (%p105) target = $region53
    $region52: #{tpu_custom_call.1} parent=1 // pred_region
      %v108 = vld [vmem:[#allocation12] sm:$0xff]
      %109 = vst [vmem:[#allocation2] sm:$0xff] %v108
      %v110 = vld [vmem:[#allocation13] sm:$0xff]
      %111 = vst [vmem:[#allocation3] sm:$0xff] %v110
    $region53: #{tpu_custom_call.1} parent=1 // pred_fallthru
      _
    %v112 = vld [vmem:[#allocation4] sm:$0xff]
    %v113 = vld [vmem:[#allocation4 + $0x8] sm:$0xff]
    %v114 = vld [vmem:[#allocation4 + $0x10] sm:$0xff]
    %v115 = vld [vmem:[#allocation4 + $0x18] sm:$0xff]
    %v116 = vld [vmem:[#allocation4 + $0x20] sm:$0xff]
    %v117 = vld [vmem:[#allocation4 + $0x28] sm:$0xff]
    %v118 = vld [vmem:[#allocation4 + $0x30] sm:$0xff]
    %v119 = vld [vmem:[#allocation4 + $0x38] sm:$0xff]
    %v120 = vld [vmem:[#allocation7] sm:$0xff]
    %v121 = vld [vmem:[#allocation7 + $0x8] sm:$0xff]
    %v122 = vld [vmem:[#allocation7 + $0x10] sm:$0xff]
    %v123 = vld [vmem:[#allocation7 + $0x18] sm:$0xff]
    %v124 = vld [vmem:[#allocation7 + $0x20] sm:$0xff]
    %v125 = vld [vmem:[#allocation7 + $0x28] sm:$0xff]
    %v126 = vld [vmem:[#allocation7 + $0x30] sm:$0xff]
    %v127 = vld [vmem:[#allocation7 + $0x38] sm:$0xff]
    %v128 = vld [vmem:[#allocation7 + $0x40] sm:$0xff]
    %v129 = vld [vmem:[#allocation7 + $0x48] sm:$0xff]
    %v130 = vld [vmem:[#allocation7 + $0x50] sm:$0xff]
    %v131 = vld [vmem:[#allocation7 + $0x58] sm:$0xff]
    %v132 = vld [vmem:[#allocation7 + $0x60] sm:$0xff]
    %v133 = vld [vmem:[#allocation7 + $0x68] sm:$0xff]
    %v134 = vld [vmem:[#allocation7 + $0x70] sm:$0xff]
    %v135 = vld [vmem:[#allocation7 + $0x78] sm:$0xff]
    %v136 = vld [vmem:[#allocation10] sm:$0xf]
    %v138 = vlaneseq
    %v139 = vshrl.u32 %v138, 7
    %v140 = vsub.s32 0, %v139
    %v141 = vrot.slane %v136, %v140
    %v142 = vlaneseq
    %v143 = vshrl.u32 %v142, 7
    %v144 = vsub.s32 1, %v143
    %v145 = vrot.slane %v136, %v144
    %v146 = vlaneseq
    %v147 = vshrl.u32 %v146, 7
    %v148 = vsub.s32 2, %v147
    %v149 = vrot.slane %v136, %v148
    %v150 = vlaneseq
    %v151 = vshrl.u32 %v150, 7
    %v152 = vsub.s32 3, %v151
    %v153 = vrot.slane %v136, %v152
    %vm158 = vcmask 261120
    %v160 = vsel %vm158, %v112, 0
    %v163 = vsel %vm158, %v113, 0
    %v166 = vsel %vm158, %v114, 0
    %v169 = vsel %vm158, %v115, 0
    %v172 = vsel %vm158, %v116, 0
    %v175 = vsel %vm158, %v117, 0
    %v178 = vsel %vm158, %v118, 0
    %v181 = vsel %vm158, %v119, 0
    %183 = vmatprep.subr.mxu0 %v121
    %184 = vmatpush1.msra.mxu0 %v120
    %185 = vmatprep.subr.mxu0 %v125
    %186 = vmatpush1.msra.mxu0 %v124
    %187 = vmatprep.subr.mxu0 %v129
    %188 = vmatpush1.msra.mxu0 %v128
    %189 = vmatprep.subr.mxu0 %v133
    %190 = vmatpush1.msra.mxu0 %v132
    %191 = vmatprep.subr.mxu0 0.0
    %192 = vmatpush1.msra.mxu0 0.0
    %193 = vmatprep.subr.mxu0 0.0
    %194 = vmatpush1.msra.mxu0 0.0
    %195 = vmatprep.subr.mxu0 0.0
    %196 = vmatpush1.msra.mxu0 0.0
    %197 = vmatprep.subr.mxu0 0.0
    %198 = vmatpush1.msra.mxu0 0.0
    %199 = vmatprep.subr.mxu0 0.0
    %200 = vmatpush1.msra.mxu0 0.0
    %201 = vmatprep.subr.mxu0 0.0
    %202 = vmatpush1.msra.mxu0 0.0
    %203 = vmatprep.subr.mxu0 0.0
    %204 = vmatpush1.msra.mxu0 0.0
    %205 = vmatprep.subr.mxu0 0.0
    %206 = vmatpush1.msra.mxu0 0.0
    %207 = vmatprep.subr.mxu0 0.0
    %208 = vmatpush1.msra.mxu0 0.0
    %209 = vmatprep.subr.mxu0 0.0
    %210 = vmatpush1.msra.mxu0 0.0
    %211 = vmatprep.subr.mxu0 0.0
    %212 = vmatpush1.msra.mxu0 0.0
    %213 = vmatprep.subr.mxu0 0.0
    %214 = vmatpush1.msra.mxu0 0.0
    %215 = vmatprep.subr.mxu0 0.0
    %216 = vmatpush1.msra.mxu0 0.0
    %217 = vmatprep.subr.mxu0 0.0
    %218 = vmatpush1.msra.mxu0 0.0
    %219 = vmatprep.subr.mxu0 0.0
    %220 = vmatpush1.msra.mxu0 0.0
    %221 = vmatprep.subr.mxu0 0.0
    %222 = vmatpush1.msra.mxu0 0.0
    %223 = vmatprep.subr.mxu0 0.0
    %224 = vmatpush1.msra.mxu0 0.0
    %225 = vmatprep.subr.mxu0 0.0
    %226 = vmatpush1.msra.mxu0 0.0
    %227 = vmatprep.subr.mxu0 0.0
    %228 = vmatpush1.msra.mxu0 0.0
    %229 = vmatprep.subr.mxu0 0.0
    %230 = vmatpush1.msra.mxu0 0.0
    %231 = vmatprep.subr.mxu0 0.0
    %232 = vmatpush1.msra.mxu0 0.0
    %233 = vmatprep.subr.mxu0 0.0
    %234 = vmatpush1.msra.mxu0 0.0
    %235 = vmatprep.subr.mxu0 0.0
    %236 = vmatpush1.msra.mxu0 0.0
    %237 = vmatprep.subr.mxu0 0.0
    %238 = vmatpush1.msra.mxu0 0.0
    %239 = vmatprep.subr.mxu0 0.0
    %240 = vmatpush1.msra.mxu0 0.0
    %241 = vmatprep.subr.mxu0 0.0
    %242 = vmatpush1.msra.mxu0 0.0
    %243 = vmatprep.subr.mxu0 0.0
    %244 = vmatpush1.msra.mxu0 0.0
    %245 = vmatprep.subr.mxu0 0.0
    %246 = vmatpush1.msra.mxu0 0.0
    %247 = vmatprep.mubr.f32.mxu0 0.0
    %248 = vmatmul.mubr.f32.gmra.mrb[0].mxu0 %v160
    %v249 = vpop.f32.mrb[0].mxu0
    %v250 = vadd.f32 %v141, %v249
    %v251 = vpop.f32.mrb[0].mxu0
    %v252 = vadd.f32 %v145, %v251
    %253 = vmatprep.mubr.f32.mxu0 0.0
    %254 = vmatmul.mubr.f32.gmra.mrb[0].mxu0 %v163
    %v255 = vpop.f32.mrb[0].mxu0
    %v256 = vadd.f32 %v141, %v255
    %v257 = vpop.f32.mrb[0].mxu0
    %v258 = vadd.f32 %v145, %v257
    %259 = vmatprep.mubr.f32.mxu0 0.0
    %260 = vmatmul.mubr.f32.gmra.mrb[0].mxu0 %v166
    %v261 = vpop.f32.mrb[0].mxu0
    %v262 = vadd.f32 %v141, %v261
    %v263 = vpop.f32.mrb[0].mxu0
    %v264 = vadd.f32 %v145, %v263
    %265 = vmatprep.mubr.f32.mxu0 0.0
    %266 = vmatmul.mubr.f32.gmra.mrb[0].mxu0 %v169
    %v267 = vpop.f32.mrb[0].mxu0
    %v268 = vadd.f32 %v141, %v267
    %v269 = vpop.f32.mrb[0].mxu0
    %v270 = vadd.f32 %v145, %v269
    %271 = vmatprep.mubr.f32.mxu0 0.0
    %272 = vmatmul.mubr.f32.gmra.mrb[0].mxu0 %v172
    %v273 = vpop.f32.mrb[0].mxu0
    %v274 = vadd.f32 %v141, %v273
    %v275 = vpop.f32.mrb[0].mxu0
    %v276 = vadd.f32 %v145, %v275
    %277 = vmatprep.mubr.f32.mxu0 0.0
    %278 = vmatmul.mubr.f32.gmra.mrb[0].mxu0 %v175
    %v279 = vpop.f32.mrb[0].mxu0
    %v280 = vadd.f32 %v141, %v279
    %v281 = vpop.f32.mrb[0].mxu0
    %v282 = vadd.f32 %v145, %v281
    %283 = vmatprep.mubr.f32.mxu0 0.0
    %284 = vmatmul.mubr.f32.gmra.mrb[0].mxu0 %v178
    %v285 = vpop.f32.mrb[0].mxu0
    %v286 = vadd.f32 %v141, %v285
    %v287 = vpop.f32.mrb[0].mxu0
    %v288 = vadd.f32 %v145, %v287
    %289 = vmatprep.mubr.f32.mxu0 0.0
    %290 = vmatmul.mubr.f32.gmra.mrb[0].mxu0 %v181
    %v291 = vpop.f32.mrb[0].mxu0
    %v292 = vadd.f32 %v141, %v291
    %v293 = vpop.f32.mrb[0].mxu0
    %v294 = vadd.f32 %v145, %v293
    %295 = vdwg.mxu0
    %296 = vmatprep.subr.mxu0 %v123
    %297 = vmatpush1.msra.mxu0 %v122
    %298 = vmatprep.subr.mxu0 %v127
    %299 = vmatpush1.msra.mxu0 %v126
    %300 = vmatprep.subr.mxu0 %v131
    %301 = vmatpush1.msra.mxu0 %v130
    %302 = vmatprep.subr.mxu0 %v135
    %303 = vmatpush1.msra.mxu0 %v134
    %304 = vmatprep.subr.mxu0 0.0
    %305 = vmatpush1.msra.mxu0 0.0
    %306 = vmatprep.subr.mxu0 0.0
    %307 = vmatpush1.msra.mxu0 0.0
    %308 = vmatprep.subr.mxu0 0.0
    %309 = vmatpush1.msra.mxu0 0.0
    %310 = vmatprep.subr.mxu0 0.0
    %311 = vmatpush1.msra.mxu0 0.0
    %312 = vmatprep.subr.mxu0 0.0
    %313 = vmatpush1.msra.mxu0 0.0
    %314 = vmatprep.subr.mxu0 0.0
    %315 = vmatpush1.msra.mxu0 0.0
    %316 = vmatprep.subr.mxu0 0.0
    %317 = vmatpush1.msra.mxu0 0.0
    %318 = vmatprep.subr.mxu0 0.0
    %319 = vmatpush1.msra.mxu0 0.0
    %320 = vmatprep.subr.mxu0 0.0
    %321 = vmatpush1.msra.mxu0 0.0
    %322 = vmatprep.subr.mxu0 0.0
    %323 = vmatpush1.msra.mxu0 0.0
    %324 = vmatprep.subr.mxu0 0.0
    %325 = vmatpush1.msra.mxu0 0.0
    %326 = vmatprep.subr.mxu0 0.0
    %327 = vmatpush1.msra.mxu0 0.0
    %328 = vmatprep.subr.mxu0 0.0
    %329 = vmatpush1.msra.mxu0 0.0
    %330 = vmatprep.subr.mxu0 0.0
    %331 = vmatpush1.msra.mxu0 0.0
    %332 = vmatprep.subr.mxu0 0.0
    %333 = vmatpush1.msra.mxu0 0.0
    %334 = vmatprep.subr.mxu0 0.0
    %335 = vmatpush1.msra.mxu0 0.0
    %336 = vmatprep.subr.mxu0 0.0
    %337 = vmatpush1.msra.mxu0 0.0
    %338 = vmatprep.subr.mxu0 0.0
    %339 = vmatpush1.msra.mxu0 0.0
    %340 = vmatprep.subr.mxu0 0.0
    %341 = vmatpush1.msra.mxu0 0.0
    %342 = vmatprep.subr.mxu0 0.0
    %343 = vmatpush1.msra.mxu0 0.0
    %344 = vmatprep.subr.mxu0 0.0
    %345 = vmatpush1.msra.mxu0 0.0
    %346 = vmatprep.subr.mxu0 0.0
    %347 = vmatpush1.msra.mxu0 0.0
    %348 = vmatprep.subr.mxu0 0.0
    %349 = vmatpush1.msra.mxu0 0.0
    %350 = vmatprep.subr.mxu0 0.0
    %351 = vmatpush1.msra.mxu0 0.0
    %352 = vmatprep.subr.mxu0 0.0
    %353 = vmatpush1.msra.mxu0 0.0
    %354 = vmatprep.subr.mxu0 0.0
    %355 = vmatpush1.msra.mxu0 0.0
    %356 = vmatprep.subr.mxu0 0.0
    %357 = vmatpush1.msra.mxu0 0.0
    %358 = vmatprep.subr.mxu0 0.0
    %359 = vmatpush1.msra.mxu0 0.0
    %360 = vmatprep.mubr.f32.mxu0 0.0
    %361 = vmatmul.mubr.f32.gmra.mrb[0].mxu0 %v160
    %v362 = vpop.f32.mrb[0].mxu0
    %v363 = vadd.f32 %v149, %v362
    %v364 = vpop.f32.mrb[0].mxu0
    %v365 = vadd.f32 %v153, %v364
    %366 = vmatprep.mubr.f32.mxu0 0.0
    %367 = vmatmul.mubr.f32.gmra.mrb[0].mxu0 %v163
    %v368 = vpop.f32.mrb[0].mxu0
    %v369 = vadd.f32 %v149, %v368
    %v370 = vpop.f32.mrb[0].mxu0
    %v371 = vadd.f32 %v153, %v370
    %372 = vmatprep.mubr.f32.mxu0 0.0
    %373 = vmatmul.mubr.f32.gmra.mrb[0].mxu0 %v166
    %v374 = vpop.f32.mrb[0].mxu0
    %v375 = vadd.f32 %v149, %v374
    %v376 = vpop.f32.mrb[0].mxu0
    %v377 = vadd.f32 %v153, %v376
    %378 = vmatprep.mubr.f32.mxu0 0.0
    %379 = vmatmul.mubr.f32.gmra.mrb[0].mxu0 %v169
    %v380 = vpop.f32.mrb[0].mxu0
    %v381 = vadd.f32 %v149, %v380
    %v382 = vpop.f32.mrb[0].mxu0
    %v383 = vadd.f32 %v153, %v382
    %384 = vmatprep.mubr.f32.mxu0 0.0
    %385 = vmatmul.mubr.f32.gmra.mrb[0].mxu0 %v172
    %v386 = vpop.f32.mrb[0].mxu0
    %v387 = vadd.f32 %v149, %v386
    %v388 = vpop.f32.mrb[0].mxu0
    %v389 = vadd.f32 %v153, %v388
    %390 = vmatprep.mubr.f32.mxu0 0.0
    %391 = vmatmul.mubr.f32.gmra.mrb[0].mxu0 %v175
    %v392 = vpop.f32.mrb[0].mxu0
    %v393 = vadd.f32 %v149, %v392
    %v394 = vpop.f32.mrb[0].mxu0
    %v395 = vadd.f32 %v153, %v394
    %396 = vmatprep.mubr.f32.mxu0 0.0
    %397 = vmatmul.mubr.f32.gmra.mrb[0].mxu0 %v178
    %v398 = vpop.f32.mrb[0].mxu0
    %v399 = vadd.f32 %v149, %v398
    %v400 = vpop.f32.mrb[0].mxu0
    %v401 = vadd.f32 %v153, %v400
    %402 = vmatprep.mubr.f32.mxu0 0.0
    %403 = vmatmul.mubr.f32.gmra.mrb[0].mxu0 %v181
    %v404 = vpop.f32.mrb[0].mxu0
    %v405 = vadd.f32 %v149, %v404
    %v406 = vpop.f32.mrb[0].mxu0
    %v407 = vadd.f32 %v153, %v406
    %408 = vdwg.mxu0
    %v409 = vld [vmem:[#allocation2] sm:$0xff]
    %v410 = vld [vmem:[#allocation3] sm:$0xff]
    %v411 = vld [vmem:[#allocation9] sm:$0xff]
    %v412 = vld [vmem:[#allocation9 + $0x8] sm:$0xff]
    %v413 = vld [vmem:[#allocation9 + $0x10] sm:$0xff]
    %v414 = vld [vmem:[#allocation9 + $0x18] sm:$0xff]
    %v415 = vld [vmem:[#allocation9 + $0x20] sm:$0xff]
    %v416 = vld [vmem:[#allocation9 + $0x28] sm:$0xff]
    %v417 = vld [vmem:[#allocation9 + $0x30] sm:$0xff]
    %v418 = vld [vmem:[#allocation9 + $0x38] sm:$0xff]
    %v419 = vld [vmem:[#allocation9 + $0x40] sm:$0xff]
    %v420 = vld [vmem:[#allocation9 + $0x48] sm:$0xff]
    %v421 = vld [vmem:[#allocation9 + $0x50] sm:$0xff]
    %v422 = vld [vmem:[#allocation9 + $0x58] sm:$0xff]
    %v423 = vld [vmem:[#allocation9 + $0x60] sm:$0xff]
    %v424 = vld [vmem:[#allocation9 + $0x68] sm:$0xff]
    %v425 = vld [vmem:[#allocation9 + $0x70] sm:$0xff]
    %v426 = vld [vmem:[#allocation9 + $0x78] sm:$0xff]
    %v427 = vld [vmem:[#allocation9 + $0x80] sm:$0xff]
    %v428 = vld [vmem:[#allocation9 + $0x88] sm:$0xff]
    %v429 = vld [vmem:[#allocation9 + $0x90] sm:$0xff]
    %v430 = vld [vmem:[#allocation9 + $0x98] sm:$0xff]
    %v431 = vld [vmem:[#allocation9 + $0xa0] sm:$0xff]
    %v432 = vld [vmem:[#allocation9 + $0xa8] sm:$0xff]
    %v433 = vld [vmem:[#allocation9 + $0xb0] sm:$0xff]
    %v434 = vld [vmem:[#allocation9 + $0xb8] sm:$0xff]
    %v435 = vld [vmem:[#allocation9 + $0xc0] sm:$0xff]
    %v436 = vld [vmem:[#allocation9 + $0xc8] sm:$0xff]
    %v437 = vld [vmem:[#allocation9 + $0xd0] sm:$0xff]
    %v438 = vld [vmem:[#allocation9 + $0xd8] sm:$0xff]
    %v439 = vld [vmem:[#allocation9 + $0xe0] sm:$0xff]
    %v440 = vld [vmem:[#allocation9 + $0xe8] sm:$0xff]
    %v441 = vld [vmem:[#allocation9 + $0xf0] sm:$0xff]
    %v442 = vld [vmem:[#allocation9 + $0xf8] sm:$0xff]
    %v443 = vld [vmem:[#allocation9 + $0x100] sm:$0xff]
    %v444 = vld [vmem:[#allocation9 + $0x108] sm:$0xff]
    %v445 = vld [vmem:[#allocation9 + $0x110] sm:$0xff]
    %v446 = vld [vmem:[#allocation9 + $0x118] sm:$0xff]
    %v447 = vld [vmem:[#allocation9 + $0x120] sm:$0xff]
    %v448 = vld [vmem:[#allocation9 + $0x128] sm:$0xff]
    %v449 = vld [vmem:[#allocation9 + $0x130] sm:$0xff]
    %v450 = vld [vmem:[#allocation9 + $0x138] sm:$0xff]
    %v451 = vld [vmem:[#allocation9 + $0x140] sm:$0xff]
    %v452 = vld [vmem:[#allocation9 + $0x148] sm:$0xff]
    %v453 = vld [vmem:[#allocation9 + $0x150] sm:$0xff]
    %v454 = vld [vmem:[#allocation9 + $0x158] sm:$0xff]
    %v455 = vld [vmem:[#allocation9 + $0x160] sm:$0xff]
    %v456 = vld [vmem:[#allocation9 + $0x168] sm:$0xff]
    %v457 = vld [vmem:[#allocation9 + $0x170] sm:$0xff]
    %v458 = vld [vmem:[#allocation9 + $0x178] sm:$0xff]
    %v459 = vld [vmem:[#allocation9 + $0x180] sm:$0xff]
    %v460 = vld [vmem:[#allocation9 + $0x188] sm:$0xff]
    %v461 = vld [vmem:[#allocation9 + $0x190] sm:$0xff]
    %v462 = vld [vmem:[#allocation9 + $0x198] sm:$0xff]
    %v463 = vld [vmem:[#allocation9 + $0x1a0] sm:$0xff]
    %v464 = vld [vmem:[#allocation9 + $0x1a8] sm:$0xff]
    %v465 = vld [vmem:[#allocation9 + $0x1b0] sm:$0xff]
    %v466 = vld [vmem:[#allocation9 + $0x1b8] sm:$0xff]
    %v467 = vld [vmem:[#allocation9 + $0x1c0] sm:$0xff]
    %v468 = vld [vmem:[#allocation9 + $0x1c8] sm:$0xff]
    %v469 = vld [vmem:[#allocation9 + $0x1d0] sm:$0xff]
    %v470 = vld [vmem:[#allocation9 + $0x1d8] sm:$0xff]
    %v471 = vld [vmem:[#allocation9 + $0x1e0] sm:$0xff]
    %v472 = vld [vmem:[#allocation9 + $0x1e8] sm:$0xff]
    %v473 = vld [vmem:[#allocation9 + $0x1f0] sm:$0xff]
    %v474 = vld [vmem:[#allocation9 + $0x1f8] sm:$0xff]
    %475 = vmatprep.subr.mxu0 %v412
    %476 = vmatpush1.msra.mxu0 %v411
    %477 = vmatprep.subr.mxu0 %v416
    %478 = vmatpush1.msra.mxu0 %v415
    %479 = vmatprep.subr.mxu0 %v420
    %480 = vmatpush1.msra.mxu0 %v419
    %481 = vmatprep.subr.mxu0 %v424
    %482 = vmatpush1.msra.mxu0 %v423
    %483 = vmatprep.subr.mxu0 %v428
    %484 = vmatpush1.msra.mxu0 %v427
    %485 = vmatprep.subr.mxu0 %v432
    %486 = vmatpush1.msra.mxu0 %v431
    %487 = vmatprep.subr.mxu0 %v436
    %488 = vmatpush1.msra.mxu0 %v435
    %489 = vmatprep.subr.mxu0 %v440
    %490 = vmatpush1.msra.mxu0 %v439
    %491 = vmatprep.subr.mxu0 %v444
    %492 = vmatpush1.msra.mxu0 %v443
    %493 = vmatprep.subr.mxu0 %v448
    %494 = vmatpush1.msra.mxu0 %v447
    %495 = vmatprep.subr.mxu0 %v452
    %496 = vmatpush1.msra.mxu0 %v451
    %497 = vmatprep.subr.mxu0 %v456
    %498 = vmatpush1.msra.mxu0 %v455
    %499 = vmatprep.subr.mxu0 %v460
    %500 = vmatpush1.msra.mxu0 %v459
    %501 = vmatprep.subr.mxu0 %v464
    %502 = vmatpush1.msra.mxu0 %v463
    %503 = vmatprep.subr.mxu0 %v468
    %504 = vmatpush1.msra.mxu0 %v467
    %505 = vmatprep.subr.mxu0 %v472
    %506 = vmatpush1.msra.mxu0 %v471
    %507 = vmatprep.subr.mxu0 0.0
    %508 = vmatpush1.msra.mxu0 0.0
    %509 = vmatprep.subr.mxu0 0.0
    %510 = vmatpush1.msra.mxu0 0.0
    %511 = vmatprep.subr.mxu0 0.0
    %512 = vmatpush1.msra.mxu0 0.0
    %513 = vmatprep.subr.mxu0 0.0
    %514 = vmatpush1.msra.mxu0 0.0
    %515 = vmatprep.subr.mxu0 0.0
    %516 = vmatpush1.msra.mxu0 0.0
    %517 = vmatprep.subr.mxu0 0.0
    %518 = vmatpush1.msra.mxu0 0.0
    %519 = vmatprep.subr.mxu0 0.0
    %520 = vmatpush1.msra.mxu0 0.0
    %521 = vmatprep.subr.mxu0 0.0
    %522 = vmatpush1.msra.mxu0 0.0
    %523 = vmatprep.subr.mxu0 0.0
    %524 = vmatpush1.msra.mxu0 0.0
    %525 = vmatprep.subr.mxu0 0.0
    %526 = vmatpush1.msra.mxu0 0.0
    %527 = vmatprep.subr.mxu0 0.0
    %528 = vmatpush1.msra.mxu0 0.0
    %529 = vmatprep.subr.mxu0 0.0
    %530 = vmatpush1.msra.mxu0 0.0
    %531 = vmatprep.subr.mxu0 0.0
    %532 = vmatpush1.msra.mxu0 0.0
    %533 = vmatprep.subr.mxu0 0.0
    %534 = vmatpush1.msra.mxu0 0.0
    %535 = vmatprep.subr.mxu0 0.0
    %536 = vmatpush1.msra.mxu0 0.0
    %537 = vmatprep.subr.mxu0 0.0
    %538 = vmatpush1.msra.mxu0 0.0
    %539 = vmatprep.mubr.f32.mxu0 0.0
    %540 = vmatmul.mubr.f32.gmra.mrb[0].mxu0 %v409
    %v541 = vpop.f32.mrb[0].mxu0
    %v542 = vadd.f32 0.0, %v541
    %v543 = vpop.f32.mrb[0].mxu0
    %v544 = vadd.f32 0.0, %v543
    %545 = vdwg.mxu0
    %546 = vmatprep.subr.mxu0 %v414
    %547 = vmatpush1.msra.mxu0 %v413
    %548 = vmatprep.subr.mxu0 %v418
    %549 = vmatpush1.msra.mxu0 %v417
    %550 = vmatprep.subr.mxu0 %v422
    %551 = vmatpush1.msra.mxu0 %v421
    %552 = vmatprep.subr.mxu0 %v426
    %553 = vmatpush1.msra.mxu0 %v425
    %554 = vmatprep.subr.mxu0 %v430
    %555 = vmatpush1.msra.mxu0 %v429
    %556 = vmatprep.subr.mxu0 %v434
    %557 = vmatpush1.msra.mxu0 %v433
    %558 = vmatprep.subr.mxu0 %v438
    %559 = vmatpush1.msra.mxu0 %v437
    %560 = vmatprep.subr.mxu0 %v442
    %561 = vmatpush1.msra.mxu0 %v441
    %562 = vmatprep.subr.mxu0 %v446
    %563 = vmatpush1.msra.mxu0 %v445
    %564 = vmatprep.subr.mxu0 %v450
    %565 = vmatpush1.msra.mxu0 %v449
    %566 = vmatprep.subr.mxu0 %v454
    %567 = vmatpush1.msra.mxu0 %v453
    %568 = vmatprep.subr.mxu0 %v458
    %569 = vmatpush1.msra.mxu0 %v457
    %570 = vmatprep.subr.mxu0 %v462
    %571 = vmatpush1.msra.mxu0 %v461
    %572 = vmatprep.subr.mxu0 %v466
    %573 = vmatpush1.msra.mxu0 %v465
    %574 = vmatprep.subr.mxu0 %v470
    %575 = vmatpush1.msra.mxu0 %v469
    %576 = vmatprep.subr.mxu0 %v474
    %577 = vmatpush1.msra.mxu0 %v473
    %578 = vmatprep.subr.mxu0 0.0
    %579 = vmatpush1.msra.mxu0 0.0
    %580 = vmatprep.subr.mxu0 0.0
    %581 = vmatpush1.msra.mxu0 0.0
    %582 = vmatprep.subr.mxu0 0.0
    %583 = vmatpush1.msra.mxu0 0.0
    %584 = vmatprep.subr.mxu0 0.0
    %585 = vmatpush1.msra.mxu0 0.0
    %586 = vmatprep.subr.mxu0 0.0
    %587 = vmatpush1.msra.mxu0 0.0
    %588 = vmatprep.subr.mxu0 0.0
    %589 = vmatpush1.msra.mxu0 0.0
    %590 = vmatprep.subr.mxu0 0.0
    %591 = vmatpush1.msra.mxu0 0.0
    %592 = vmatprep.subr.mxu0 0.0
    %593 = vmatpush1.msra.mxu0 0.0
    %594 = vmatprep.subr.mxu0 0.0
    %595 = vmatpush1.msra.mxu0 0.0
    %596 = vmatprep.subr.mxu0 0.0
    %597 = vmatpush1.msra.mxu0 0.0
    %598 = vmatprep.subr.mxu0 0.0
    %599 = vmatpush1.msra.mxu0 0.0
    %600 = vmatprep.subr.mxu0 0.0
    %601 = vmatpush1.msra.mxu0 0.0
    %602 = vmatprep.subr.mxu0 0.0
    %603 = vmatpush1.msra.mxu0 0.0
    %604 = vmatprep.subr.mxu0 0.0
    %605 = vmatpush1.msra.mxu0 0.0
    %606 = vmatprep.subr.mxu0 0.0
    %607 = vmatpush1.msra.mxu0 0.0
    %608 = vmatprep.subr.mxu0 0.0
    %609 = vmatpush1.msra.mxu0 0.0
    %610 = vmatprep.mubr.f32.mxu0 0.0
    %611 = vmatmul.mubr.f32.gmra.mrb[0].mxu0 %v409
    %v612 = vpop.f32.mrb[0].mxu0
    %v613 = vadd.f32 0.0, %v612
    %v614 = vpop.f32.mrb[0].mxu0
    %v615 = vadd.f32 0.0, %v614
    %616 = vdwg.mxu0
    %v617 = vadd.f32 %v250, %v542
    %v618 = vadd.f32 %v252, %v544
    %v619 = vadd.f32 %v363, %v613
    %v620 = vadd.f32 %v365, %v615
    %v621 = vxor.u32 %v617, 2147483648
    %v622 = vmul.f32 %v621, 1.442695
    %v623 = vpow.pop %v622
    %v624 = vadd.f32 %v623, 1.0
    %v625 = vrcp.pop %v624
    %v626 = vmul.f32 1.0, %v625
    %v627 = vxor.u32 %v618, 2147483648
    %v628 = vmul.f32 %v627, 1.442695
    %v629 = vpow.pop %v628
    %v630 = vadd.f32 %v629, 1.0
    %v631 = vrcp.pop %v630
    %v632 = vmul.f32 1.0, %v631
    %v633 = vtanh.pop %v619
    %v634 = vxor.u32 %v620, 2147483648
    %v635 = vmul.f32 %v634, 1.442695
    %v636 = vpow.pop %v635
    %v637 = vadd.f32 %v636, 1.0
    %v638 = vrcp.pop %v637
    %v639 = vmul.f32 1.0, %v638
    %v640 = vmul.f32 %v632, %v410
    %v641 = vmul.f32 %v626, %v633
    %v642 = vadd.f32 %v640, %v641
    %v643 = vtanh.pop %v642
    %v644 = vmul.f32 %v639, %v643
    %645 = vst [vmem:[#allocation15] sm:$0xff] %v644
    %646 = vmatprep.subr.mxu0 %v412
    %647 = vmatpush1.msra.mxu0 %v411
    %648 = vmatprep.subr.mxu0 %v416
    %649 = vmatpush1.msra.mxu0 %v415
    %650 = vmatprep.subr.mxu0 %v420
    %651 = vmatpush1.msra.mxu0 %v419
    %652 = vmatprep.subr.mxu0 %v424
    %653 = vmatpush1.msra.mxu0 %v423
    %654 = vmatprep.subr.mxu0 %v428
    %655 = vmatpush1.msra.mxu0 %v427
    %656 = vmatprep.subr.mxu0 %v432
    %657 = vmatpush1.msra.mxu0 %v431
    %658 = vmatprep.subr.mxu0 %v436
    %659 = vmatpush1.msra.mxu0 %v435
    %660 = vmatprep.subr.mxu0 %v440
    %661 = vmatpush1.msra.mxu0 %v439
    %662 = vmatprep.subr.mxu0 %v444
    %663 = vmatpush1.msra.mxu0 %v443
    %664 = vmatprep.subr.mxu0 %v448
    %665 = vmatpush1.msra.mxu0 %v447
    %666 = vmatprep.subr.mxu0 %v452
    %667 = vmatpush1.msra.mxu0 %v451
    %668 = vmatprep.subr.mxu0 %v456
    %669 = vmatpush1.msra.mxu0 %v455
    %670 = vmatprep.subr.mxu0 %v460
    %671 = vmatpush1.msra.mxu0 %v459
    %672 = vmatprep.subr.mxu0 %v464
    %673 = vmatpush1.msra.mxu0 %v463
    %674 = vmatprep.subr.mxu0 %v468
    %675 = vmatpush1.msra.mxu0 %v467
    %676 = vmatprep.subr.mxu0 %v472
    %677 = vmatpush1.msra.mxu0 %v471
    %678 = vmatprep.subr.mxu0 0.0
    %679 = vmatpush1.msra.mxu0 0.0
    %680 = vmatprep.subr.mxu0 0.0
    %681 = vmatpush1.msra.mxu0 0.0
    %682 = vmatprep.subr.mxu0 0.0
    %683 = vmatpush1.msra.mxu0 0.0
    %684 = vmatprep.subr.mxu0 0.0
    %685 = vmatpush1.msra.mxu0 0.0
    %686 = vmatprep.subr.mxu0 0.0
    %687 = vmatpush1.msra.mxu0 0.0
    %688 = vmatprep.subr.mxu0 0.0
    %689 = vmatpush1.msra.mxu0 0.0
    %690 = vmatprep.subr.mxu0 0.0
    %691 = vmatpush1.msra.mxu0 0.0
    %692 = vmatprep.subr.mxu0 0.0
    %693 = vmatpush1.msra.mxu0 0.0
    %694 = vmatprep.subr.mxu0 0.0
    %695 = vmatpush1.msra.mxu0 0.0
    %696 = vmatprep.subr.mxu0 0.0
    %697 = vmatpush1.msra.mxu0 0.0
    %698 = vmatprep.subr.mxu0 0.0
    %699 = vmatpush1.msra.mxu0 0.0
    %700 = vmatprep.subr.mxu0 0.0
    %701 = vmatpush1.msra.mxu0 0.0
    %702 = vmatprep.subr.mxu0 0.0
    %703 = vmatpush1.msra.mxu0 0.0
    %704 = vmatprep.subr.mxu0 0.0
    %705 = vmatpush1.msra.mxu0 0.0
    %706 = vmatprep.subr.mxu0 0.0
    %707 = vmatpush1.msra.mxu0 0.0
    %708 = vmatprep.subr.mxu0 0.0
    %709 = vmatpush1.msra.mxu0 0.0
    %710 = vmatprep.mubr.f32.mxu0 0.0
    %711 = vmatmul.mubr.f32.gmra.mrb[0].mxu0 %v644
    %v712 = vpop.f32.mrb[0].mxu0
    %v713 = vadd.f32 0.0, %v712
    %v714 = vpop.f32.mrb[0].mxu0
    %v715 = vadd.f32 0.0, %v714
    %716 = vdwg.mxu0
    %717 = vmatprep.subr.mxu0 %v414
    %718 = vmatpush1.msra.mxu0 %v413
    %719 = vmatprep.subr.mxu0 %v418
    %720 = vmatpush1.msra.mxu0 %v417
    %721 = vmatprep.subr.mxu0 %v422
    %722 = vmatpush1.msra.mxu0 %v421
    %723 = vmatprep.subr.mxu0 %v426
    %724 = vmatpush1.msra.mxu0 %v425
    %725 = vmatprep.subr.mxu0 %v430
    %726 = vmatpush1.msra.mxu0 %v429
    %727 = vmatprep.subr.mxu0 %v434
    %728 = vmatpush1.msra.mxu0 %v433
    %729 = vmatprep.subr.mxu0 %v438
    %730 = vmatpush1.msra.mxu0 %v437
    %731 = vmatprep.subr.mxu0 %v442
    %732 = vmatpush1.msra.mxu0 %v441
    %733 = vmatprep.subr.mxu0 %v446
    %734 = vmatpush1.msra.mxu0 %v445
    %735 = vmatprep.subr.mxu0 %v450
    %736 = vmatpush1.msra.mxu0 %v449
    %737 = vmatprep.subr.mxu0 %v454
    %738 = vmatpush1.msra.mxu0 %v453
    %739 = vmatprep.subr.mxu0 %v458
    %740 = vmatpush1.msra.mxu0 %v457
    %741 = vmatprep.subr.mxu0 %v462
    %742 = vmatpush1.msra.mxu0 %v461
    %743 = vmatprep.subr.mxu0 %v466
    %744 = vmatpush1.msra.mxu0 %v465
    %745 = vmatprep.subr.mxu0 %v470
    %746 = vmatpush1.msra.mxu0 %v469
    %747 = vmatprep.subr.mxu0 %v474
    %748 = vmatpush1.msra.mxu0 %v473
    %749 = vmatprep.subr.mxu0 0.0
    %750 = vmatpush1.msra.mxu0 0.0
    %751 = vmatprep.subr.mxu0 0.0
    %752 = vmatpush1.msra.mxu0 0.0
    %753 = vmatprep.subr.mxu0 0.0
    %754 = vmatpush1.msra.mxu0 0.0
    %755 = vmatprep.subr.mxu0 0.0
    %756 = vmatpush1.msra.mxu0 0.0
    %757 = vmatprep.subr.mxu0 0.0
    %758 = vmatpush1.msra.mxu0 0.0
    %759 = vmatprep.subr.mxu0 0.0
    %760 = vmatpush1.msra.mxu0 0.0
    %761 = vmatprep.subr.mxu0 0.0
    %762 = vmatpush1.msra.mxu0 0.0
    %763 = vmatprep.subr.mxu0 0.0
    %764 = vmatpush1.msra.mxu0 0.0
    %765 = vmatprep.subr.mxu0 0.0
    %766 = vmatpush1.msra.mxu0 0.0
    %767 = vmatprep.subr.mxu0 0.0
    %768 = vmatpush1.msra.mxu0 0.0
    %769 = vmatprep.subr.mxu0 0.0
    %770 = vmatpush1.msra.mxu0 0.0
    %771 = vmatprep.subr.mxu0 0.0
    %772 = vmatpush1.msra.mxu0 0.0
    %773 = vmatprep.subr.mxu0 0.0
    %774 = vmatpush1.msra.mxu0 0.0
    %775 = vmatprep.subr.mxu0 0.0
    %776 = vmatpush1.msra.mxu0 0.0
    %777 = vmatprep.subr.mxu0 0.0
    %778 = vmatpush1.msra.mxu0 0.0
    %779 = vmatprep.subr.mxu0 0.0
    %780 = vmatpush1.msra.mxu0 0.0
    %781 = vmatprep.mubr.f32.mxu0 0.0
    %782 = vmatmul.mubr.f32.gmra.mrb[0].mxu0 %v644
    %v783 = vpop.f32.mrb[0].mxu0
    %v784 = vadd.f32 0.0, %v783
    %v785 = vpop.f32.mrb[0].mxu0
    %v786 = vadd.f32 0.0, %v785
    %787 = vdwg.mxu0
    %v788 = vadd.f32 %v256, %v713
    %v789 = vadd.f32 %v258, %v715
    %v790 = vadd.f32 %v369, %v784
    %v791 = vadd.f32 %v371, %v786
    %v792 = vxor.u32 %v788, 2147483648
    %v793 = vmul.f32 %v792, 1.442695
    %v794 = vpow.pop %v793
    %v795 = vadd.f32 %v794, 1.0
    %v796 = vrcp.pop %v795
    %v797 = vmul.f32 1.0, %v796
    %v798 = vxor.u32 %v789, 2147483648
    %v799 = vmul.f32 %v798, 1.442695
    %v800 = vpow.pop %v799
    %v801 = vadd.f32 %v800, 1.0
    %v802 = vrcp.pop %v801
    %v803 = vmul.f32 1.0, %v802
    %v804 = vtanh.pop %v790
    %v805 = vxor.u32 %v791, 2147483648
    %v806 = vmul.f32 %v805, 1.442695
    %v807 = vpow.pop %v806
    %v808 = vadd.f32 %v807, 1.0
    %v809 = vrcp.pop %v808
    %v810 = vmul.f32 1.0, %v809
    %v811 = vmul.f32 %v803, %v642
    %v812 = vmul.f32 %v797, %v804
    %v813 = vadd.f32 %v811, %v812
    %v814 = vtanh.pop %v813
    %v815 = vmul.f32 %v810, %v814
    %s816 = scalar_lea.vmem [#allocation15], 8
    %817 = vst [vmem:[%s816] sm:$0xff] %v815
    %818 = vmatprep.subr.mxu0 %v412
    %819 = vmatpush1.msra.mxu0 %v411
    %820 = vmatprep.subr.mxu0 %v416
    %821 = vmatpush1.msra.mxu0 %v415
    %822 = vmatprep.subr.mxu0 %v420
    %823 = vmatpush1.msra.mxu0 %v419
    %824 = vmatprep.subr.mxu0 %v424
    %825 = vmatpush1.msra.mxu0 %v423
    %826 = vmatprep.subr.mxu0 %v428
    %827 = vmatpush1.msra.mxu0 %v427
    %828 = vmatprep.subr.mxu0 %v432
    %829 = vmatpush1.msra.mxu0 %v431
    %830 = vmatprep.subr.mxu0 %v436
    %831 = vmatpush1.msra.mxu0 %v435
    %832 = vmatprep.subr.mxu0 %v440
    %833 = vmatpush1.msra.mxu0 %v439
    %834 = vmatprep.subr.mxu0 %v444
    %835 = vmatpush1.msra.mxu0 %v443
    %836 = vmatprep.subr.mxu0 %v448
    %837 = vmatpush1.msra.mxu0 %v447
    %838 = vmatprep.subr.mxu0 %v452
    %839 = vmatpush1.msra.mxu0 %v451
    %840 = vmatprep.subr.mxu0 %v456
    %841 = vmatpush1.msra.mxu0 %v455
    %842 = vmatprep.subr.mxu0 %v460
    %843 = vmatpush1.msra.mxu0 %v459
    %844 = vmatprep.subr.mxu0 %v464
    %845 = vmatpush1.msra.mxu0 %v463
    %846 = vmatprep.subr.mxu0 %v468
    %847 = vmatpush1.msra.mxu0 %v467
    %848 = vmatprep.subr.mxu0 %v472
    %849 = vmatpush1.msra.mxu0 %v471
    %850 = vmatprep.subr.mxu0 0.0
    %851 = vmatpush1.msra.mxu0 0.0
    %852 = vmatprep.subr.mxu0 0.0
    %853 = vmatpush1.msra.mxu0 0.0
    %854 = vmatprep.subr.mxu0 0.0
    %855 = vmatpush1.msra.mxu0 0.0
    %856 = vmatprep.subr.mxu0 0.0
    %857 = vmatpush1.msra.mxu0 0.0
    %858 = vmatprep.subr.mxu0 0.0
    %859 = vmatpush1.msra.mxu0 0.0
    %860 = vmatprep.subr.mxu0 0.0
    %861 = vmatpush1.msra.mxu0 0.0
    %862 = vmatprep.subr.mxu0 0.0
    %863 = vmatpush1.msra.mxu0 0.0
    %864 = vmatprep.subr.mxu0 0.0
    %865 = vmatpush1.msra.mxu0 0.0
    %866 = vmatprep.subr.mxu0 0.0
    %867 = vmatpush1.msra.mxu0 0.0
    %868 = vmatprep.subr.mxu0 0.0
    %869 = vmatpush1.msra.mxu0 0.0
    %870 = vmatprep.subr.mxu0 0.0
    %871 = vmatpush1.msra.mxu0 0.0
    %872 = vmatprep.subr.mxu0 0.0
    %873 = vmatpush1.msra.mxu0 0.0
    %874 = vmatprep.subr.mxu0 0.0
    %875 = vmatpush1.msra.mxu0 0.0
    %876 = vmatprep.subr.mxu0 0.0
    %877 = vmatpush1.msra.mxu0 0.0
    %878 = vmatprep.subr.mxu0 0.0
    %879 = vmatpush1.msra.mxu0 0.0
    %880 = vmatprep.subr.mxu0 0.0
    %881 = vmatpush1.msra.mxu0 0.0
    %882 = vmatprep.mubr.f32.mxu0 0.0
    %883 = vmatmul.mubr.f32.gmra.mrb[0].mxu0 %v815
    %v884 = vpop.f32.mrb[0].mxu0
    %v885 = vadd.f32 0.0, %v884
    %v886 = vpop.f32.mrb[0].mxu0
    %v887 = vadd.f32 0.0, %v886
    %888 = vdwg.mxu0
    %889 = vmatprep.subr.mxu0 %v414
    %890 = vmatpush1.msra.mxu0 %v413
    %891 = vmatprep.subr.mxu0 %v418
    %892 = vmatpush1.msra.mxu0 %v417
    %893 = vmatprep.subr.mxu0 %v422
    %894 = vmatpush1.msra.mxu0 %v421
    %895 = vmatprep.subr.mxu0 %v426
    %896 = vmatpush1.msra.mxu0 %v425
    %897 = vmatprep.subr.mxu0 %v430
    %898 = vmatpush1.msra.mxu0 %v429
    %899 = vmatprep.subr.mxu0 %v434
    %900 = vmatpush1.msra.mxu0 %v433
    %901 = vmatprep.subr.mxu0 %v438
    %902 = vmatpush1.msra.mxu0 %v437
    %903 = vmatprep.subr.mxu0 %v442
    %904 = vmatpush1.msra.mxu0 %v441
    %905 = vmatprep.subr.mxu0 %v446
    %906 = vmatpush1.msra.mxu0 %v445
    %907 = vmatprep.subr.mxu0 %v450
    %908 = vmatpush1.msra.mxu0 %v449
    %909 = vmatprep.subr.mxu0 %v454
    %910 = vmatpush1.msra.mxu0 %v453
    %911 = vmatprep.subr.mxu0 %v458
    %912 = vmatpush1.msra.mxu0 %v457
    %913 = vmatprep.subr.mxu0 %v462
    %914 = vmatpush1.msra.mxu0 %v461
    %915 = vmatprep.subr.mxu0 %v466
    %916 = vmatpush1.msra.mxu0 %v465
    %917 = vmatprep.subr.mxu0 %v470
    %918 = vmatpush1.msra.mxu0 %v469
    %919 = vmatprep.subr.mxu0 %v474
    %920 = vmatpush1.msra.mxu0 %v473
    %921 = vmatprep.subr.mxu0 0.0
    %922 = vmatpush1.msra.mxu0 0.0
    %923 = vmatprep.subr.mxu0 0.0
    %924 = vmatpush1.msra.mxu0 0.0
    %925 = vmatprep.subr.mxu0 0.0
    %926 = vmatpush1.msra.mxu0 0.0
    %927 = vmatprep.subr.mxu0 0.0
    %928 = vmatpush1.msra.mxu0 0.0
    %929 = vmatprep.subr.mxu0 0.0
    %930 = vmatpush1.msra.mxu0 0.0
    %931 = vmatprep.subr.mxu0 0.0
    %932 = vmatpush1.msra.mxu0 0.0
    %933 = vmatprep.subr.mxu0 0.0
    %934 = vmatpush1.msra.mxu0 0.0
    %935 = vmatprep.subr.mxu0 0.0
    %936 = vmatpush1.msra.mxu0 0.0
    %937 = vmatprep.subr.mxu0 0.0
    %938 = vmatpush1.msra.mxu0 0.0
    %939 = vmatprep.subr.mxu0 0.0
    %940 = vmatpush1.msra.mxu0 0.0
    %941 = vmatprep.subr.mxu0 0.0
    %942 = vmatpush1.msra.mxu0 0.0
    %943 = vmatprep.subr.mxu0 0.0
    %944 = vmatpush1.msra.mxu0 0.0
    %945 = vmatprep.subr.mxu0 0.0
    %946 = vmatpush1.msra.mxu0 0.0
    %947 = vmatprep.subr.mxu0 0.0
    %948 = vmatpush1.msra.mxu0 0.0
    %949 = vmatprep.subr.mxu0 0.0
    %950 = vmatpush1.msra.mxu0 0.0
    %951 = vmatprep.subr.mxu0 0.0
    %952 = vmatpush1.msra.mxu0 0.0
    %953 = vmatprep.mubr.f32.mxu0 0.0
    %954 = vmatmul.mubr.f32.gmra.mrb[0].mxu0 %v815
    %v955 = vpop.f32.mrb[0].mxu0
    %v956 = vadd.f32 0.0, %v955
    %v957 = vpop.f32.mrb[0].mxu0
    %v958 = vadd.f32 0.0, %v957
    %959 = vdwg.mxu0
    %v960 = vadd.f32 %v262, %v885
    %v961 = vadd.f32 %v264, %v887
    %v962 = vadd.f32 %v375, %v956
    %v963 = vadd.f32 %v377, %v958
    %v964 = vxor.u32 %v960, 2147483648
    %v965 = vmul.f32 %v964, 1.442695
    %v966 = vpow.pop %v965
    %v967 = vadd.f32 %v966, 1.0
    %v968 = vrcp.pop %v967
    %v969 = vmul.f32 1.0, %v968
    %v970 = vxor.u32 %v961, 2147483648
    %v971 = vmul.f32 %v970, 1.442695
    %v972 = vpow.pop %v971
    %v973 = vadd.f32 %v972, 1.0
    %v974 = vrcp.pop %v973
    %v975 = vmul.f32 1.0, %v974
    %v976 = vtanh.pop %v962
    %v977 = vxor.u32 %v963, 2147483648
    %v978 = vmul.f32 %v977, 1.442695
    %v979 = vpow.pop %v978
    %v980 = vadd.f32 %v979, 1.0
    %v981 = vrcp.pop %v980
    %v982 = vmul.f32 1.0, %v981
    %v983 = vmul.f32 %v975, %v813
    %v984 = vmul.f32 %v969, %v976
    %v985 = vadd.f32 %v983, %v984
    %v986 = vtanh.pop %v985
    %v987 = vmul.f32 %v982, %v986
    %s988 = scalar_lea.vmem [#allocation15], 16
    %989 = vst [vmem:[%s988] sm:$0xff] %v987
    %990 = vmatprep.subr.mxu0 %v412
    %991 = vmatpush1.msra.mxu0 %v411
    %992 = vmatprep.subr.mxu0 %v416
    %993 = vmatpush1.msra.mxu0 %v415
    %994 = vmatprep.subr.mxu0 %v420
    %995 = vmatpush1.msra.mxu0 %v419
    %996 = vmatprep.subr.mxu0 %v424
    %997 = vmatpush1.msra.mxu0 %v423
    %998 = vmatprep.subr.mxu0 %v428
    %999 = vmatpush1.msra.mxu0 %v427
    %1000 = vmatprep.subr.mxu0 %v432
    %1001 = vmatpush1.msra.mxu0 %v431
    %1002 = vmatprep.subr.mxu0 %v436
    %1003 = vmatpush1.msra.mxu0 %v435
    %1004 = vmatprep.subr.mxu0 %v440
    %1005 = vmatpush1.msra.mxu0 %v439
    %1006 = vmatprep.subr.mxu0 %v444
    %1007 = vmatpush1.msra.mxu0 %v443
    %1008 = vmatprep.subr.mxu0 %v448
    %1009 = vmatpush1.msra.mxu0 %v447
    %1010 = vmatprep.subr.mxu0 %v452
    %1011 = vmatpush1.msra.mxu0 %v451
    %1012 = vmatprep.subr.mxu0 %v456
    %1013 = vmatpush1.msra.mxu0 %v455
    %1014 = vmatprep.subr.mxu0 %v460
    %1015 = vmatpush1.msra.mxu0 %v459
    %1016 = vmatprep.subr.mxu0 %v464
    %1017 = vmatpush1.msra.mxu0 %v463
    %1018 = vmatprep.subr.mxu0 %v468
    %1019 = vmatpush1.msra.mxu0 %v467
    %1020 = vmatprep.subr.mxu0 %v472
    %1021 = vmatpush1.msra.mxu0 %v471
    %1022 = vmatprep.subr.mxu0 0.0
    %1023 = vmatpush1.msra.mxu0 0.0
    %1024 = vmatprep.subr.mxu0 0.0
    %1025 = vmatpush1.msra.mxu0 0.0
    %1026 = vmatprep.subr.mxu0 0.0
    %1027 = vmatpush1.msra.mxu0 0.0
    %1028 = vmatprep.subr.mxu0 0.0
    %1029 = vmatpush1.msra.mxu0 0.0
    %1030 = vmatprep.subr.mxu0 0.0
    %1031 = vmatpush1.msra.mxu0 0.0
    %1032 = vmatprep.subr.mxu0 0.0
    %1033 = vmatpush1.msra.mxu0 0.0
    %1034 = vmatprep.subr.mxu0 0.0
    %1035 = vmatpush1.msra.mxu0 0.0
    %1036 = vmatprep.subr.mxu0 0.0
    %1037 = vmatpush1.msra.mxu0 0.0
    %1038 = vmatprep.subr.mxu0 0.0
    %1039 = vmatpush1.msra.mxu0 0.0
    %1040 = vmatprep.subr.mxu0 0.0
    %1041 = vmatpush1.msra.mxu0 0.0
    %1042 = vmatprep.subr.mxu0 0.0
    %1043 = vmatpush1.msra.mxu0 0.0
    %1044 = vmatprep.subr.mxu0 0.0
    %1045 = vmatpush1.msra.mxu0 0.0
    %1046 = vmatprep.subr.mxu0 0.0
    %1047 = vmatpush1.msra.mxu0 0.0
    %1048 = vmatprep.subr.mxu0 0.0
    %1049 = vmatpush1.msra.mxu0 0.0
    %1050 = vmatprep.subr.mxu0 0.0
    %1051 = vmatpush1.msra.mxu0 0.0
    %1052 = vmatprep.subr.mxu0 0.0
    %1053 = vmatpush1.msra.mxu0 0.0
    %1054 = vmatprep.mubr.f32.mxu0 0.0
    %1055 = vmatmul.mubr.f32.gmra.mrb[0].mxu0 %v987
    %v1056 = vpop.f32.mrb[0].mxu0
    %v1057 = vadd.f32 0.0, %v1056
    %v1058 = vpop.f32.mrb[0].mxu0
    %v1059 = vadd.f32 0.0, %v1058
    %1060 = vdwg.mxu0
    %1061 = vmatprep.subr.mxu0 %v414
    %1062 = vmatpush1.msra.mxu0 %v413
    %1063 = vmatprep.subr.mxu0 %v418
    %1064 = vmatpush1.msra.mxu0 %v417
    %1065 = vmatprep.subr.mxu0 %v422
    %1066 = vmatpush1.msra.mxu0 %v421
    %1067 = vmatprep.subr.mxu0 %v426
    %1068 = vmatpush1.msra.mxu0 %v425
    %1069 = vmatprep.subr.mxu0 %v430
    %1070 = vmatpush1.msra.mxu0 %v429
    %1071 = vmatprep.subr.mxu0 %v434
    %1072 = vmatpush1.msra.mxu0 %v433
    %1073 = vmatprep.subr.mxu0 %v438
    %1074 = vmatpush1.msra.mxu0 %v437
    %1075 = vmatprep.subr.mxu0 %v442
    %1076 = vmatpush1.msra.mxu0 %v441
    %1077 = vmatprep.subr.mxu0 %v446
    %1078 = vmatpush1.msra.mxu0 %v445
    %1079 = vmatprep.subr.mxu0 %v450
    %1080 = vmatpush1.msra.mxu0 %v449
    %1081 = vmatprep.subr.mxu0 %v454
    %1082 = vmatpush1.msra.mxu0 %v453
    %1083 = vmatprep.subr.mxu0 %v458
    %1084 = vmatpush1.msra.mxu0 %v457
    %1085 = vmatprep.subr.mxu0 %v462
    %1086 = vmatpush1.msra.mxu0 %v461
    %1087 = vmatprep.subr.mxu0 %v466
    %1088 = vmatpush1.msra.mxu0 %v465
    %1089 = vmatprep.subr.mxu0 %v470
    %1090 = vmatpush1.msra.mxu0 %v469
    %1091 = vmatprep.subr.mxu0 %v474
    %1092 = vmatpush1.msra.mxu0 %v473
    %1093 = vmatprep.subr.mxu0 0.0
    %1094 = vmatpush1.msra.mxu0 0.0
    %1095 = vmatprep.subr.mxu0 0.0
    %1096 = vmatpush1.msra.mxu0 0.0
    %1097 = vmatprep.subr.mxu0 0.0
    %1098 = vmatpush1.msra.mxu0 0.0
    %1099 = vmatprep.subr.mxu0 0.0
    %1100 = vmatpush1.msra.mxu0 0.0
    %1101 = vmatprep.subr.mxu0 0.0
    %1102 = vmatpush1.msra.mxu0 0.0
    %1103 = vmatprep.subr.mxu0 0.0
    %1104 = vmatpush1.msra.mxu0 0.0
    %1105 = vmatprep.subr.mxu0 0.0
    %1106 = vmatpush1.msra.mxu0 0.0
    %1107 = vmatprep.subr.mxu0 0.0
    %1108 = vmatpush1.msra.mxu0 0.0
    %1109 = vmatprep.subr.mxu0 0.0
    %1110 = vmatpush1.msra.mxu0 0.0
    %1111 = vmatprep.subr.mxu0 0.0
    %1112 = vmatpush1.msra.mxu0 0.0
    %1113 = vmatprep.subr.mxu0 0.0
    %1114 = vmatpush1.msra.mxu0 0.0
    %1115 = vmatprep.subr.mxu0 0.0
    %1116 = vmatpush1.msra.mxu0 0.0
    %1117 = vmatprep.subr.mxu0 0.0
    %1118 = vmatpush1.msra.mxu0 0.0
    %1119 = vmatprep.subr.mxu0 0.0
    %1120 = vmatpush1.msra.mxu0 0.0
    %1121 = vmatprep.subr.mxu0 0.0
    %1122 = vmatpush1.msra.mxu0 0.0
    %1123 = vmatprep.subr.mxu0 0.0
    %1124 = vmatpush1.msra.mxu0 0.0
    %1125 = vmatprep.mubr.f32.mxu0 0.0
    %1126 = vmatmul.mubr.f32.gmra.mrb[0].mxu0 %v987
    %v1127 = vpop.f32.mrb[0].mxu0
    %v1128 = vadd.f32 0.0, %v1127
    %v1129 = vpop.f32.mrb[0].mxu0
    %v1130 = vadd.f32 0.0, %v1129
    %1131 = vdwg.mxu0
    %v1132 = vadd.f32 %v268, %v1057
    %v1133 = vadd.f32 %v270, %v1059
    %v1134 = vadd.f32 %v381, %v1128
    %v1135 = vadd.f32 %v383, %v1130
    %v1136 = vxor.u32 %v1132, 2147483648
    %v1137 = vmul.f32 %v1136, 1.442695
    %v1138 = vpow.pop %v1137
    %v1139 = vadd.f32 %v1138, 1.0
    %v1140 = vrcp.pop %v1139
    %v1141 = vmul.f32 1.0, %v1140
    %v1142 = vxor.u32 %v1133, 2147483648
    %v1143 = vmul.f32 %v1142, 1.442695
    %v1144 = vpow.pop %v1143
    %v1145 = vadd.f32 %v1144, 1.0
    %v1146 = vrcp.pop %v1145
    %v1147 = vmul.f32 1.0, %v1146
    %v1148 = vtanh.pop %v1134
    %v1149 = vxor.u32 %v1135, 2147483648
    %v1150 = vmul.f32 %v1149, 1.442695
    %v1151 = vpow.pop %v1150
    %v1152 = vadd.f32 %v1151, 1.0
    %v1153 = vrcp.pop %v1152
    %v1154 = vmul.f32 1.0, %v1153
    %v1155 = vmul.f32 %v1147, %v985
    %v1156 = vmul.f32 %v1141, %v1148
    %v1157 = vadd.f32 %v1155, %v1156
    %v1158 = vtanh.pop %v1157
    %v1159 = vmul.f32 %v1154, %v1158
    %s1160 = scalar_lea.vmem [#allocation15], 24
    %1161 = vst [vmem:[%s1160] sm:$0xff] %v1159
    %1162 = vmatprep.subr.mxu0 %v412
    %1163 = vmatpush1.msra.mxu0 %v411
    %1164 = vmatprep.subr.mxu0 %v416
    %1165 = vmatpush1.msra.mxu0 %v415
    %1166 = vmatprep.subr.mxu0 %v420
    %1167 = vmatpush1.msra.mxu0 %v419
    %1168 = vmatprep.subr.mxu0 %v424
    %1169 = vmatpush1.msra.mxu0 %v423
    %1170 = vmatprep.subr.mxu0 %v428
    %1171 = vmatpush1.msra.mxu0 %v427
    %1172 = vmatprep.subr.mxu0 %v432
    %1173 = vmatpush1.msra.mxu0 %v431
    %1174 = vmatprep.subr.mxu0 %v436
    %1175 = vmatpush1.msra.mxu0 %v435
    %1176 = vmatprep.subr.mxu0 %v440
    %1177 = vmatpush1.msra.mxu0 %v439
    %1178 = vmatprep.subr.mxu0 %v444
    %1179 = vmatpush1.msra.mxu0 %v443
    %1180 = vmatprep.subr.mxu0 %v448
    %1181 = vmatpush1.msra.mxu0 %v447
    %1182 = vmatprep.subr.mxu0 %v452
    %1183 = vmatpush1.msra.mxu0 %v451
    %1184 = vmatprep.subr.mxu0 %v456
    %1185 = vmatpush1.msra.mxu0 %v455
    %1186 = vmatprep.subr.mxu0 %v460
    %1187 = vmatpush1.msra.mxu0 %v459
    %1188 = vmatprep.subr.mxu0 %v464
    %1189 = vmatpush1.msra.mxu0 %v463
    %1190 = vmatprep.subr.mxu0 %v468
    %1191 = vmatpush1.msra.mxu0 %v467
    %1192 = vmatprep.subr.mxu0 %v472
    %1193 = vmatpush1.msra.mxu0 %v471
    %1194 = vmatprep.subr.mxu0 0.0
    %1195 = vmatpush1.msra.mxu0 0.0
    %1196 = vmatprep.subr.mxu0 0.0
    %1197 = vmatpush1.msra.mxu0 0.0
    %1198 = vmatprep.subr.mxu0 0.0
    %1199 = vmatpush1.msra.mxu0 0.0
    %1200 = vmatprep.subr.mxu0 0.0
    %1201 = vmatpush1.msra.mxu0 0.0
    %1202 = vmatprep.subr.mxu0 0.0
    %1203 = vmatpush1.msra.mxu0 0.0
    %1204 = vmatprep.subr.mxu0 0.0
    %1205 = vmatpush1.msra.mxu0 0.0
    %1206 = vmatprep.subr.mxu0 0.0
    %1207 = vmatpush1.msra.mxu0 0.0
    %1208 = vmatprep.subr.mxu0 0.0
    %1209 = vmatpush1.msra.mxu0 0.0
    %1210 = vmatprep.subr.mxu0 0.0
    %1211 = vmatpush1.msra.mxu0 0.0
    %1212 = vmatprep.subr.mxu0 0.0
    %1213 = vmatpush1.msra.mxu0 0.0
    %1214 = vmatprep.subr.mxu0 0.0
    %1215 = vmatpush1.msra.mxu0 0.0
    %1216 = vmatprep.subr.mxu0 0.0
    %1217 = vmatpush1.msra.mxu0 0.0
    %1218 = vmatprep.subr.mxu0 0.0
    %1219 = vmatpush1.msra.mxu0 0.0
    %1220 = vmatprep.subr.mxu0 0.0
    %1221 = vmatpush1.msra.mxu0 0.0
    %1222 = vmatprep.subr.mxu0 0.0
    %1223 = vmatpush1.msra.mxu0 0.0
    %1224 = vmatprep.subr.mxu0 0.0
    %1225 = vmatpush1.msra.mxu0 0.0
    %1226 = vmatprep.mubr.f32.mxu0 0.0
    %1227 = vmatmul.mubr.f32.gmra.mrb[0].mxu0 %v1159
    %v1228 = vpop.f32.mrb[0].mxu0
    %v1229 = vadd.f32 0.0, %v1228
    %v1230 = vpop.f32.mrb[0].mxu0
    %v1231 = vadd.f32 0.0, %v1230
    %1232 = vdwg.mxu0
    %1233 = vmatprep.subr.mxu0 %v414
    %1234 = vmatpush1.msra.mxu0 %v413
    %1235 = vmatprep.subr.mxu0 %v418
    %1236 = vmatpush1.msra.mxu0 %v417
    %1237 = vmatprep.subr.mxu0 %v422
    %1238 = vmatpush1.msra.mxu0 %v421
    %1239 = vmatprep.subr.mxu0 %v426
    %1240 = vmatpush1.msra.mxu0 %v425
    %1241 = vmatprep.subr.mxu0 %v430
    %1242 = vmatpush1.msra.mxu0 %v429
    %1243 = vmatprep.subr.mxu0 %v434
    %1244 = vmatpush1.msra.mxu0 %v433
    %1245 = vmatprep.subr.mxu0 %v438
    %1246 = vmatpush1.msra.mxu0 %v437
    %1247 = vmatprep.subr.mxu0 %v442
    %1248 = vmatpush1.msra.mxu0 %v441
    %1249 = vmatprep.subr.mxu0 %v446
    %1250 = vmatpush1.msra.mxu0 %v445
    %1251 = vmatprep.subr.mxu0 %v450
    %1252 = vmatpush1.msra.mxu0 %v449
    %1253 = vmatprep.subr.mxu0 %v454
    %1254 = vmatpush1.msra.mxu0 %v453
    %1255 = vmatprep.subr.mxu0 %v458
    %1256 = vmatpush1.msra.mxu0 %v457
    %1257 = vmatprep.subr.mxu0 %v462
    %1258 = vmatpush1.msra.mxu0 %v461
    %1259 = vmatprep.subr.mxu0 %v466
    %1260 = vmatpush1.msra.mxu0 %v465
    %1261 = vmatprep.subr.mxu0 %v470
    %1262 = vmatpush1.msra.mxu0 %v469
    %1263 = vmatprep.subr.mxu0 %v474
    %1264 = vmatpush1.msra.mxu0 %v473
    %1265 = vmatprep.subr.mxu0 0.0
    %1266 = vmatpush1.msra.mxu0 0.0
    %1267 = vmatprep.subr.mxu0 0.0
    %1268 = vmatpush1.msra.mxu0 0.0
    %1269 = vmatprep.subr.mxu0 0.0
    %1270 = vmatpush1.msra.mxu0 0.0
    %1271 = vmatprep.subr.mxu0 0.0
    %1272 = vmatpush1.msra.mxu0 0.0
    %1273 = vmatprep.subr.mxu0 0.0
    %1274 = vmatpush1.msra.mxu0 0.0
    %1275 = vmatprep.subr.mxu0 0.0
    %1276 = vmatpush1.msra.mxu0 0.0
    %1277 = vmatprep.subr.mxu0 0.0
    %1278 = vmatpush1.msra.mxu0 0.0
    %1279 = vmatprep.subr.mxu0 0.0
    %1280 = vmatpush1.msra.mxu0 0.0
    %1281 = vmatprep.subr.mxu0 0.0
    %1282 = vmatpush1.msra.mxu0 0.0
    %1283 = vmatprep.subr.mxu0 0.0
    %1284 = vmatpush1.msra.mxu0 0.0
    %1285 = vmatprep.subr.mxu0 0.0
    %1286 = vmatpush1.msra.mxu0 0.0
    %1287 = vmatprep.subr.mxu0 0.0
    %1288 = vmatpush1.msra.mxu0 0.0
    %1289 = vmatprep.subr.mxu0 0.0
    %1290 = vmatpush1.msra.mxu0 0.0
    %1291 = vmatprep.subr.mxu0 0.0
    %1292 = vmatpush1.msra.mxu0 0.0
    %1293 = vmatprep.subr.mxu0 0.0
    %1294 = vmatpush1.msra.mxu0 0.0
    %1295 = vmatprep.subr.mxu0 0.0
    %1296 = vmatpush1.msra.mxu0 0.0
    %1297 = vmatprep.mubr.f32.mxu0 0.0
    %1298 = vmatmul.mubr.f32.gmra.mrb[0].mxu0 %v1159
    %v1299 = vpop.f32.mrb[0].mxu0
    %v1300 = vadd.f32 0.0, %v1299
    %v1301 = vpop.f32.mrb[0].mxu0
    %v1302 = vadd.f32 0.0, %v1301
    %1303 = vdwg.mxu0
    %v1304 = vadd.f32 %v274, %v1229
    %v1305 = vadd.f32 %v276, %v1231
    %v1306 = vadd.f32 %v387, %v1300
    %v1307 = vadd.f32 %v389, %v1302
    %v1308 = vxor.u32 %v1304, 2147483648
    %v1309 = vmul.f32 %v1308, 1.442695
    %v1310 = vpow.pop %v1309
    %v1311 = vadd.f32 %v1310, 1.0
    %v1312 = vrcp.pop %v1311
    %v1313 = vmul.f32 1.0, %v1312
    %v1314 = vxor.u32 %v1305, 2147483648
    %v1315 = vmul.f32 %v1314, 1.442695
    %v1316 = vpow.pop %v1315
    %v1317 = vadd.f32 %v1316, 1.0
    %v1318 = vrcp.pop %v1317
    %v1319 = vmul.f32 1.0, %v1318
    %v1320 = vtanh.pop %v1306
    %v1321 = vxor.u32 %v1307, 2147483648
    %v1322 = vmul.f32 %v1321, 1.442695
    %v1323 = vpow.pop %v1322
    %v1324 = vadd.f32 %v1323, 1.0
    %v1325 = vrcp.pop %v1324
    %v1326 = vmul.f32 1.0, %v1325
    %v1327 = vmul.f32 %v1319, %v1157
    %v1328 = vmul.f32 %v1313, %v1320
    %v1329 = vadd.f32 %v1327, %v1328
    %v1330 = vtanh.pop %v1329
    %v1331 = vmul.f32 %v1326, %v1330
    %s1332 = scalar_lea.vmem [#allocation15], 32
    %1333 = vst [vmem:[%s1332] sm:$0xff] %v1331
    %1334 = vmatprep.subr.mxu0 %v412
    %1335 = vmatpush1.msra.mxu0 %v411
    %1336 = vmatprep.subr.mxu0 %v416
    %1337 = vmatpush1.msra.mxu0 %v415
    %1338 = vmatprep.subr.mxu0 %v420
    %1339 = vmatpush1.msra.mxu0 %v419
    %1340 = vmatprep.subr.mxu0 %v424
    %1341 = vmatpush1.msra.mxu0 %v423
    %1342 = vmatprep.subr.mxu0 %v428
    %1343 = vmatpush1.msra.mxu0 %v427
    %1344 = vmatprep.subr.mxu0 %v432
    %1345 = vmatpush1.msra.mxu0 %v431
    %1346 = vmatprep.subr.mxu0 %v436
    %1347 = vmatpush1.msra.mxu0 %v435
    %1348 = vmatprep.subr.mxu0 %v440
    %1349 = vmatpush1.msra.mxu0 %v439
    %1350 = vmatprep.subr.mxu0 %v444
    %1351 = vmatpush1.msra.mxu0 %v443
    %1352 = vmatprep.subr.mxu0 %v448
    %1353 = vmatpush1.msra.mxu0 %v447
    %1354 = vmatprep.subr.mxu0 %v452
    %1355 = vmatpush1.msra.mxu0 %v451
    %1356 = vmatprep.subr.mxu0 %v456
    %1357 = vmatpush1.msra.mxu0 %v455
    %1358 = vmatprep.subr.mxu0 %v460
    %1359 = vmatpush1.msra.mxu0 %v459
    %1360 = vmatprep.subr.mxu0 %v464
    %1361 = vmatpush1.msra.mxu0 %v463
    %1362 = vmatprep.subr.mxu0 %v468
    %1363 = vmatpush1.msra.mxu0 %v467
    %1364 = vmatprep.subr.mxu0 %v472
    %1365 = vmatpush1.msra.mxu0 %v471
    %1366 = vmatprep.subr.mxu0 0.0
    %1367 = vmatpush1.msra.mxu0 0.0
    %1368 = vmatprep.subr.mxu0 0.0
    %1369 = vmatpush1.msra.mxu0 0.0
    %1370 = vmatprep.subr.mxu0 0.0
    %1371 = vmatpush1.msra.mxu0 0.0
    %1372 = vmatprep.subr.mxu0 0.0
    %1373 = vmatpush1.msra.mxu0 0.0
    %1374 = vmatprep.subr.mxu0 0.0
    %1375 = vmatpush1.msra.mxu0 0.0
    %1376 = vmatprep.subr.mxu0 0.0
    %1377 = vmatpush1.msra.mxu0 0.0
    %1378 = vmatprep.subr.mxu0 0.0
    %1379 = vmatpush1.msra.mxu0 0.0
    %1380 = vmatprep.subr.mxu0 0.0
    %1381 = vmatpush1.msra.mxu0 0.0
    %1382 = vmatprep.subr.mxu0 0.0
    %1383 = vmatpush1.msra.mxu0 0.0
    %1384 = vmatprep.subr.mxu0 0.0
    %1385 = vmatpush1.msra.mxu0 0.0
    %1386 = vmatprep.subr.mxu0 0.0
    %1387 = vmatpush1.msra.mxu0 0.0
    %1388 = vmatprep.subr.mxu0 0.0
    %1389 = vmatpush1.msra.mxu0 0.0
    %1390 = vmatprep.subr.mxu0 0.0
    %1391 = vmatpush1.msra.mxu0 0.0
    %1392 = vmatprep.subr.mxu0 0.0
    %1393 = vmatpush1.msra.mxu0 0.0
    %1394 = vmatprep.subr.mxu0 0.0
    %1395 = vmatpush1.msra.mxu0 0.0
    %1396 = vmatprep.subr.mxu0 0.0
    %1397 = vmatpush1.msra.mxu0 0.0
    %1398 = vmatprep.mubr.f32.mxu0 0.0
    %1399 = vmatmul.mubr.f32.gmra.mrb[0].mxu0 %v1331
    %v1400 = vpop.f32.mrb[0].mxu0
    %v1401 = vadd.f32 0.0, %v1400
    %v1402 = vpop.f32.mrb[0].mxu0
    %v1403 = vadd.f32 0.0, %v1402
    %1404 = vdwg.mxu0
    %1405 = vmatprep.subr.mxu0 %v414
    %1406 = vmatpush1.msra.mxu0 %v413
    %1407 = vmatprep.subr.mxu0 %v418
    %1408 = vmatpush1.msra.mxu0 %v417
    %1409 = vmatprep.subr.mxu0 %v422
    %1410 = vmatpush1.msra.mxu0 %v421
    %1411 = vmatprep.subr.mxu0 %v426
    %1412 = vmatpush1.msra.mxu0 %v425
    %1413 = vmatprep.subr.mxu0 %v430
    %1414 = vmatpush1.msra.mxu0 %v429
    %1415 = vmatprep.subr.mxu0 %v434
    %1416 = vmatpush1.msra.mxu0 %v433
    %1417 = vmatprep.subr.mxu0 %v438
    %1418 = vmatpush1.msra.mxu0 %v437
    %1419 = vmatprep.subr.mxu0 %v442
    %1420 = vmatpush1.msra.mxu0 %v441
    %1421 = vmatprep.subr.mxu0 %v446
    %1422 = vmatpush1.msra.mxu0 %v445
    %1423 = vmatprep.subr.mxu0 %v450
    %1424 = vmatpush1.msra.mxu0 %v449
    %1425 = vmatprep.subr.mxu0 %v454
    %1426 = vmatpush1.msra.mxu0 %v453
    %1427 = vmatprep.subr.mxu0 %v458
    %1428 = vmatpush1.msra.mxu0 %v457
    %1429 = vmatprep.subr.mxu0 %v462
    %1430 = vmatpush1.msra.mxu0 %v461
    %1431 = vmatprep.subr.mxu0 %v466
    %1432 = vmatpush1.msra.mxu0 %v465
    %1433 = vmatprep.subr.mxu0 %v470
    %1434 = vmatpush1.msra.mxu0 %v469
    %1435 = vmatprep.subr.mxu0 %v474
    %1436 = vmatpush1.msra.mxu0 %v473
    %1437 = vmatprep.subr.mxu0 0.0
    %1438 = vmatpush1.msra.mxu0 0.0
    %1439 = vmatprep.subr.mxu0 0.0
    %1440 = vmatpush1.msra.mxu0 0.0
    %1441 = vmatprep.subr.mxu0 0.0
    %1442 = vmatpush1.msra.mxu0 0.0
    %1443 = vmatprep.subr.mxu0 0.0
    %1444 = vmatpush1.msra.mxu0 0.0
    %1445 = vmatprep.subr.mxu0 0.0
    %1446 = vmatpush1.msra.mxu0 0.0
    %1447 = vmatprep.subr.mxu0 0.0
    %1448 = vmatpush1.msra.mxu0 0.0
    %1449 = vmatprep.subr.mxu0 0.0
    %1450 = vmatpush1.msra.mxu0 0.0
    %1451 = vmatprep.subr.mxu0 0.0
    %1452 = vmatpush1.msra.mxu0 0.0
    %1453 = vmatprep.subr.mxu0 0.0
    %1454 = vmatpush1.msra.mxu0 0.0
    %1455 = vmatprep.subr.mxu0 0.0
    %1456 = vmatpush1.msra.mxu0 0.0
    %1457 = vmatprep.subr.mxu0 0.0
    %1458 = vmatpush1.msra.mxu0 0.0
    %1459 = vmatprep.subr.mxu0 0.0
    %1460 = vmatpush1.msra.mxu0 0.0
    %1461 = vmatprep.subr.mxu0 0.0
    %1462 = vmatpush1.msra.mxu0 0.0
    %1463 = vmatprep.subr.mxu0 0.0
    %1464 = vmatpush1.msra.mxu0 0.0
    %1465 = vmatprep.subr.mxu0 0.0
    %1466 = vmatpush1.msra.mxu0 0.0
    %1467 = vmatprep.subr.mxu0 0.0
    %1468 = vmatpush1.msra.mxu0 0.0
    %1469 = vmatprep.mubr.f32.mxu0 0.0
    %1470 = vmatmul.mubr.f32.gmra.mrb[0].mxu0 %v1331
    %v1471 = vpop.f32.mrb[0].mxu0
    %v1472 = vadd.f32 0.0, %v1471
    %v1473 = vpop.f32.mrb[0].mxu0
    %v1474 = vadd.f32 0.0, %v1473
    %1475 = vdwg.mxu0
    %v1476 = vadd.f32 %v280, %v1401
    %v1477 = vadd.f32 %v282, %v1403
    %v1478 = vadd.f32 %v393, %v1472
    %v1479 = vadd.f32 %v395, %v1474
    %v1480 = vxor.u32 %v1476, 2147483648
    %v1481 = vmul.f32 %v1480, 1.442695
    %v1482 = vpow.pop %v1481
    %v1483 = vadd.f32 %v1482, 1.0
    %v1484 = vrcp.pop %v1483
    %v1485 = vmul.f32 1.0, %v1484
    %v1486 = vxor.u32 %v1477, 2147483648
    %v1487 = vmul.f32 %v1486, 1.442695
    %v1488 = vpow.pop %v1487
    %v1489 = vadd.f32 %v1488, 1.0
    %v1490 = vrcp.pop %v1489
    %v1491 = vmul.f32 1.0, %v1490
    %v1492 = vtanh.pop %v1478
    %v1493 = vxor.u32 %v1479, 2147483648
    %v1494 = vmul.f32 %v1493, 1.442695
    %v1495 = vpow.pop %v1494
    %v1496 = vadd.f32 %v1495, 1.0
    %v1497 = vrcp.pop %v1496
    %v1498 = vmul.f32 1.0, %v1497
    %v1499 = vmul.f32 %v1491, %v1329
    %v1500 = vmul.f32 %v1485, %v1492
    %v1501 = vadd.f32 %v1499, %v1500
    %v1502 = vtanh.pop %v1501
    %v1503 = vmul.f32 %v1498, %v1502
    %s1504 = scalar_lea.vmem [#allocation15], 40
    %1505 = vst [vmem:[%s1504] sm:$0xff] %v1503
    %1506 = vmatprep.subr.mxu0 %v412
    %1507 = vmatpush1.msra.mxu0 %v411
    %1508 = vmatprep.subr.mxu0 %v416
    %1509 = vmatpush1.msra.mxu0 %v415
    %1510 = vmatprep.subr.mxu0 %v420
    %1511 = vmatpush1.msra.mxu0 %v419
    %1512 = vmatprep.subr.mxu0 %v424
    %1513 = vmatpush1.msra.mxu0 %v423
    %1514 = vmatprep.subr.mxu0 %v428
    %1515 = vmatpush1.msra.mxu0 %v427
    %1516 = vmatprep.subr.mxu0 %v432
    %1517 = vmatpush1.msra.mxu0 %v431
    %1518 = vmatprep.subr.mxu0 %v436
    %1519 = vmatpush1.msra.mxu0 %v435
    %1520 = vmatprep.subr.mxu0 %v440
    %1521 = vmatpush1.msra.mxu0 %v439
    %1522 = vmatprep.subr.mxu0 %v444
    %1523 = vmatpush1.msra.mxu0 %v443
    %1524 = vmatprep.subr.mxu0 %v448
    %1525 = vmatpush1.msra.mxu0 %v447
    %1526 = vmatprep.subr.mxu0 %v452
    %1527 = vmatpush1.msra.mxu0 %v451
    %1528 = vmatprep.subr.mxu0 %v456
    %1529 = vmatpush1.msra.mxu0 %v455
    %1530 = vmatprep.subr.mxu0 %v460
    %1531 = vmatpush1.msra.mxu0 %v459
    %1532 = vmatprep.subr.mxu0 %v464
    %1533 = vmatpush1.msra.mxu0 %v463
    %1534 = vmatprep.subr.mxu0 %v468
    %1535 = vmatpush1.msra.mxu0 %v467
    %1536 = vmatprep.subr.mxu0 %v472
    %1537 = vmatpush1.msra.mxu0 %v471
    %1538 = vmatprep.subr.mxu0 0.0
    %1539 = vmatpush1.msra.mxu0 0.0
    %1540 = vmatprep.subr.mxu0 0.0
    %1541 = vmatpush1.msra.mxu0 0.0
    %1542 = vmatprep.subr.mxu0 0.0
    %1543 = vmatpush1.msra.mxu0 0.0
    %1544 = vmatprep.subr.mxu0 0.0
    %1545 = vmatpush1.msra.mxu0 0.0
    %1546 = vmatprep.subr.mxu0 0.0
    %1547 = vmatpush1.msra.mxu0 0.0
    %1548 = vmatprep.subr.mxu0 0.0
    %1549 = vmatpush1.msra.mxu0 0.0
    %1550 = vmatprep.subr.mxu0 0.0
    %1551 = vmatpush1.msra.mxu0 0.0
    %1552 = vmatprep.subr.mxu0 0.0
    %1553 = vmatpush1.msra.mxu0 0.0
    %1554 = vmatprep.subr.mxu0 0.0
    %1555 = vmatpush1.msra.mxu0 0.0
    %1556 = vmatprep.subr.mxu0 0.0
    %1557 = vmatpush1.msra.mxu0 0.0
    %1558 = vmatprep.subr.mxu0 0.0
    %1559 = vmatpush1.msra.mxu0 0.0
    %1560 = vmatprep.subr.mxu0 0.0
    %1561 = vmatpush1.msra.mxu0 0.0
    %1562 = vmatprep.subr.mxu0 0.0
    %1563 = vmatpush1.msra.mxu0 0.0
    %1564 = vmatprep.subr.mxu0 0.0
    %1565 = vmatpush1.msra.mxu0 0.0
    %1566 = vmatprep.subr.mxu0 0.0
    %1567 = vmatpush1.msra.mxu0 0.0
    %1568 = vmatprep.subr.mxu0 0.0
    %1569 = vmatpush1.msra.mxu0 0.0
    %1570 = vmatprep.mubr.f32.mxu0 0.0
    %1571 = vmatmul.mubr.f32.gmra.mrb[0].mxu0 %v1503
    %v1572 = vpop.f32.mrb[0].mxu0
    %v1573 = vadd.f32 0.0, %v1572
    %v1574 = vpop.f32.mrb[0].mxu0
    %v1575 = vadd.f32 0.0, %v1574
    %1576 = vdwg.mxu0
    %1577 = vmatprep.subr.mxu0 %v414
    %1578 = vmatpush1.msra.mxu0 %v413
    %1579 = vmatprep.subr.mxu0 %v418
    %1580 = vmatpush1.msra.mxu0 %v417
    %1581 = vmatprep.subr.mxu0 %v422
    %1582 = vmatpush1.msra.mxu0 %v421
    %1583 = vmatprep.subr.mxu0 %v426
    %1584 = vmatpush1.msra.mxu0 %v425
    %1585 = vmatprep.subr.mxu0 %v430
    %1586 = vmatpush1.msra.mxu0 %v429
    %1587 = vmatprep.subr.mxu0 %v434
    %1588 = vmatpush1.msra.mxu0 %v433
    %1589 = vmatprep.subr.mxu0 %v438
    %1590 = vmatpush1.msra.mxu0 %v437
    %1591 = vmatprep.subr.mxu0 %v442
    %1592 = vmatpush1.msra.mxu0 %v441
    %1593 = vmatprep.subr.mxu0 %v446
    %1594 = vmatpush1.msra.mxu0 %v445
    %1595 = vmatprep.subr.mxu0 %v450
    %1596 = vmatpush1.msra.mxu0 %v449
    %1597 = vmatprep.subr.mxu0 %v454
    %1598 = vmatpush1.msra.mxu0 %v453
    %1599 = vmatprep.subr.mxu0 %v458
    %1600 = vmatpush1.msra.mxu0 %v457
    %1601 = vmatprep.subr.mxu0 %v462
    %1602 = vmatpush1.msra.mxu0 %v461
    %1603 = vmatprep.subr.mxu0 %v466
    %1604 = vmatpush1.msra.mxu0 %v465
    %1605 = vmatprep.subr.mxu0 %v470
    %1606 = vmatpush1.msra.mxu0 %v469
    %1607 = vmatprep.subr.mxu0 %v474
    %1608 = vmatpush1.msra.mxu0 %v473
    %1609 = vmatprep.subr.mxu0 0.0
    %1610 = vmatpush1.msra.mxu0 0.0
    %1611 = vmatprep.subr.mxu0 0.0
    %1612 = vmatpush1.msra.mxu0 0.0
    %1613 = vmatprep.subr.mxu0 0.0
    %1614 = vmatpush1.msra.mxu0 0.0
    %1615 = vmatprep.subr.mxu0 0.0
    %1616 = vmatpush1.msra.mxu0 0.0
    %1617 = vmatprep.subr.mxu0 0.0
    %1618 = vmatpush1.msra.mxu0 0.0
    %1619 = vmatprep.subr.mxu0 0.0
    %1620 = vmatpush1.msra.mxu0 0.0
    %1621 = vmatprep.subr.mxu0 0.0
    %1622 = vmatpush1.msra.mxu0 0.0
    %1623 = vmatprep.subr.mxu0 0.0
    %1624 = vmatpush1.msra.mxu0 0.0
    %1625 = vmatprep.subr.mxu0 0.0
    %1626 = vmatpush1.msra.mxu0 0.0
    %1627 = vmatprep.subr.mxu0 0.0
    %1628 = vmatpush1.msra.mxu0 0.0
    %1629 = vmatprep.subr.mxu0 0.0
    %1630 = vmatpush1.msra.mxu0 0.0
    %1631 = vmatprep.subr.mxu0 0.0
    %1632 = vmatpush1.msra.mxu0 0.0
    %1633 = vmatprep.subr.mxu0 0.0
    %1634 = vmatpush1.msra.mxu0 0.0
    %1635 = vmatprep.subr.mxu0 0.0
    %1636 = vmatpush1.msra.mxu0 0.0
    %1637 = vmatprep.subr.mxu0 0.0
    %1638 = vmatpush1.msra.mxu0 0.0
    %1639 = vmatprep.subr.mxu0 0.0
    %1640 = vmatpush1.msra.mxu0 0.0
    %1641 = vmatprep.mubr.f32.mxu0 0.0
    %1642 = vmatmul.mubr.f32.gmra.mrb[0].mxu0 %v1503
    %v1643 = vpop.f32.mrb[0].mxu0
    %v1644 = vadd.f32 0.0, %v1643
    %v1645 = vpop.f32.mrb[0].mxu0
    %v1646 = vadd.f32 0.0, %v1645
    %1647 = vdwg.mxu0
    %v1648 = vadd.f32 %v286, %v1573
    %v1649 = vadd.f32 %v288, %v1575
    %v1650 = vadd.f32 %v399, %v1644
    %v1651 = vadd.f32 %v401, %v1646
    %v1652 = vxor.u32 %v1648, 2147483648
    %v1653 = vmul.f32 %v1652, 1.442695
    %v1654 = vpow.pop %v1653
    %v1655 = vadd.f32 %v1654, 1.0
    %v1656 = vrcp.pop %v1655
    %v1657 = vmul.f32 1.0, %v1656
    %v1658 = vxor.u32 %v1649, 2147483648
    %v1659 = vmul.f32 %v1658, 1.442695
    %v1660 = vpow.pop %v1659
    %v1661 = vadd.f32 %v1660, 1.0
    %v1662 = vrcp.pop %v1661
    %v1663 = vmul.f32 1.0, %v1662
    %v1664 = vtanh.pop %v1650
    %v1665 = vxor.u32 %v1651, 2147483648
    %v1666 = vmul.f32 %v1665, 1.442695
    %v1667 = vpow.pop %v1666
    %v1668 = vadd.f32 %v1667, 1.0
    %v1669 = vrcp.pop %v1668
    %v1670 = vmul.f32 1.0, %v1669
    %v1671 = vmul.f32 %v1663, %v1501
    %v1672 = vmul.f32 %v1657, %v1664
    %v1673 = vadd.f32 %v1671, %v1672
    %v1674 = vtanh.pop %v1673
    %v1675 = vmul.f32 %v1670, %v1674
    %s1676 = scalar_lea.vmem [#allocation15], 48
    %1677 = vst [vmem:[%s1676] sm:$0xff] %v1675
    %1678 = vmatprep.subr.mxu0 %v412
    %1679 = vmatpush1.msra.mxu0 %v411
    %1680 = vmatprep.subr.mxu0 %v416
    %1681 = vmatpush1.msra.mxu0 %v415
    %1682 = vmatprep.subr.mxu0 %v420
    %1683 = vmatpush1.msra.mxu0 %v419
    %1684 = vmatprep.subr.mxu0 %v424
    %1685 = vmatpush1.msra.mxu0 %v423
    %1686 = vmatprep.subr.mxu0 %v428
    %1687 = vmatpush1.msra.mxu0 %v427
    %1688 = vmatprep.subr.mxu0 %v432
    %1689 = vmatpush1.msra.mxu0 %v431
    %1690 = vmatprep.subr.mxu0 %v436
    %1691 = vmatpush1.msra.mxu0 %v435
    %1692 = vmatprep.subr.mxu0 %v440
    %1693 = vmatpush1.msra.mxu0 %v439
    %1694 = vmatprep.subr.mxu0 %v444
    %1695 = vmatpush1.msra.mxu0 %v443
    %1696 = vmatprep.subr.mxu0 %v448
    %1697 = vmatpush1.msra.mxu0 %v447
    %1698 = vmatprep.subr.mxu0 %v452
    %1699 = vmatpush1.msra.mxu0 %v451
    %1700 = vmatprep.subr.mxu0 %v456
    %1701 = vmatpush1.msra.mxu0 %v455
    %1702 = vmatprep.subr.mxu0 %v460
    %1703 = vmatpush1.msra.mxu0 %v459
    %1704 = vmatprep.subr.mxu0 %v464
    %1705 = vmatpush1.msra.mxu0 %v463
    %1706 = vmatprep.subr.mxu0 %v468
    %1707 = vmatpush1.msra.mxu0 %v467
    %1708 = vmatprep.subr.mxu0 %v472
    %1709 = vmatpush1.msra.mxu0 %v471
    %1710 = vmatprep.subr.mxu0 0.0
    %1711 = vmatpush1.msra.mxu0 0.0
    %1712 = vmatprep.subr.mxu0 0.0
    %1713 = vmatpush1.msra.mxu0 0.0
    %1714 = vmatprep.subr.mxu0 0.0
    %1715 = vmatpush1.msra.mxu0 0.0
    %1716 = vmatprep.subr.mxu0 0.0
    %1717 = vmatpush1.msra.mxu0 0.0
    %1718 = vmatprep.subr.mxu0 0.0
    %1719 = vmatpush1.msra.mxu0 0.0
    %1720 = vmatprep.subr.mxu0 0.0
    %1721 = vmatpush1.msra.mxu0 0.0
    %1722 = vmatprep.subr.mxu0 0.0
    %1723 = vmatpush1.msra.mxu0 0.0
    %1724 = vmatprep.subr.mxu0 0.0
    %1725 = vmatpush1.msra.mxu0 0.0
    %1726 = vmatprep.subr.mxu0 0.0
    %1727 = vmatpush1.msra.mxu0 0.0
    %1728 = vmatprep.subr.mxu0 0.0
    %1729 = vmatpush1.msra.mxu0 0.0
    %1730 = vmatprep.subr.mxu0 0.0
    %1731 = vmatpush1.msra.mxu0 0.0
    %1732 = vmatprep.subr.mxu0 0.0
    %1733 = vmatpush1.msra.mxu0 0.0
    %1734 = vmatprep.subr.mxu0 0.0
    %1735 = vmatpush1.msra.mxu0 0.0
    %1736 = vmatprep.subr.mxu0 0.0
    %1737 = vmatpush1.msra.mxu0 0.0
    %1738 = vmatprep.subr.mxu0 0.0
    %1739 = vmatpush1.msra.mxu0 0.0
    %1740 = vmatprep.subr.mxu0 0.0
    %1741 = vmatpush1.msra.mxu0 0.0
    %1742 = vmatprep.mubr.f32.mxu0 0.0
    %1743 = vmatmul.mubr.f32.gmra.mrb[0].mxu0 %v1675
    %v1744 = vpop.f32.mrb[0].mxu0
    %v1745 = vadd.f32 0.0, %v1744
    %v1746 = vpop.f32.mrb[0].mxu0
    %v1747 = vadd.f32 0.0, %v1746
    %1748 = vdwg.mxu0
    %1749 = vmatprep.subr.mxu0 %v414
    %1750 = vmatpush1.msra.mxu0 %v413
    %1751 = vmatprep.subr.mxu0 %v418
    %1752 = vmatpush1.msra.mxu0 %v417
    %1753 = vmatprep.subr.mxu0 %v422
    %1754 = vmatpush1.msra.mxu0 %v421
    %1755 = vmatprep.subr.mxu0 %v426
    %1756 = vmatpush1.msra.mxu0 %v425
    %1757 = vmatprep.subr.mxu0 %v430
    %1758 = vmatpush1.msra.mxu0 %v429
    %1759 = vmatprep.subr.mxu0 %v434
    %1760 = vmatpush1.msra.mxu0 %v433
    %1761 = vmatprep.subr.mxu0 %v438
    %1762 = vmatpush1.msra.mxu0 %v437
    %1763 = vmatprep.subr.mxu0 %v442
    %1764 = vmatpush1.msra.mxu0 %v441
    %1765 = vmatprep.subr.mxu0 %v446
    %1766 = vmatpush1.msra.mxu0 %v445
    %1767 = vmatprep.subr.mxu0 %v450
    %1768 = vmatpush1.msra.mxu0 %v449
    %1769 = vmatprep.subr.mxu0 %v454
    %1770 = vmatpush1.msra.mxu0 %v453
    %1771 = vmatprep.subr.mxu0 %v458
    %1772 = vmatpush1.msra.mxu0 %v457
    %1773 = vmatprep.subr.mxu0 %v462
    %1774 = vmatpush1.msra.mxu0 %v461
    %1775 = vmatprep.subr.mxu0 %v466
    %1776 = vmatpush1.msra.mxu0 %v465
    %1777 = vmatprep.subr.mxu0 %v470
    %1778 = vmatpush1.msra.mxu0 %v469
    %1779 = vmatprep.subr.mxu0 %v474
    %1780 = vmatpush1.msra.mxu0 %v473
    %1781 = vmatprep.subr.mxu0 0.0
    %1782 = vmatpush1.msra.mxu0 0.0
    %1783 = vmatprep.subr.mxu0 0.0
    %1784 = vmatpush1.msra.mxu0 0.0
    %1785 = vmatprep.subr.mxu0 0.0
    %1786 = vmatpush1.msra.mxu0 0.0
    %1787 = vmatprep.subr.mxu0 0.0
    %1788 = vmatpush1.msra.mxu0 0.0
    %1789 = vmatprep.subr.mxu0 0.0
    %1790 = vmatpush1.msra.mxu0 0.0
    %1791 = vmatprep.subr.mxu0 0.0
    %1792 = vmatpush1.msra.mxu0 0.0
    %1793 = vmatprep.subr.mxu0 0.0
    %1794 = vmatpush1.msra.mxu0 0.0
    %1795 = vmatprep.subr.mxu0 0.0
    %1796 = vmatpush1.msra.mxu0 0.0
    %1797 = vmatprep.subr.mxu0 0.0
    %1798 = vmatpush1.msra.mxu0 0.0
    %1799 = vmatprep.subr.mxu0 0.0
    %1800 = vmatpush1.msra.mxu0 0.0
    %1801 = vmatprep.subr.mxu0 0.0
    %1802 = vmatpush1.msra.mxu0 0.0
    %1803 = vmatprep.subr.mxu0 0.0
    %1804 = vmatpush1.msra.mxu0 0.0
    %1805 = vmatprep.subr.mxu0 0.0
    %1806 = vmatpush1.msra.mxu0 0.0
    %1807 = vmatprep.subr.mxu0 0.0
    %1808 = vmatpush1.msra.mxu0 0.0
    %1809 = vmatprep.subr.mxu0 0.0
    %1810 = vmatpush1.msra.mxu0 0.0
    %1811 = vmatprep.subr.mxu0 0.0
    %1812 = vmatpush1.msra.mxu0 0.0
    %1813 = vmatprep.mubr.f32.mxu0 0.0
    %1814 = vmatmul.mubr.f32.gmra.mrb[0].mxu0 %v1675
    %v1815 = vpop.f32.mrb[0].mxu0
    %v1816 = vadd.f32 0.0, %v1815
    %v1817 = vpop.f32.mrb[0].mxu0
    %v1818 = vadd.f32 0.0, %v1817
    %1819 = vdwg.mxu0
    %v1820 = vadd.f32 %v292, %v1745
    %v1821 = vadd.f32 %v294, %v1747
    %v1822 = vadd.f32 %v405, %v1816
    %v1823 = vadd.f32 %v407, %v1818
    %v1824 = vxor.u32 %v1820, 2147483648
    %v1825 = vmul.f32 %v1824, 1.442695
    %v1826 = vpow.pop %v1825
    %v1827 = vadd.f32 %v1826, 1.0
    %v1828 = vrcp.pop %v1827
    %v1829 = vmul.f32 1.0, %v1828
    %v1830 = vxor.u32 %v1821, 2147483648
    %v1831 = vmul.f32 %v1830, 1.442695
    %v1832 = vpow.pop %v1831
    %v1833 = vadd.f32 %v1832, 1.0
    %v1834 = vrcp.pop %v1833
    %v1835 = vmul.f32 1.0, %v1834
    %v1836 = vtanh.pop %v1822
    %v1837 = vxor.u32 %v1823, 2147483648
    %v1838 = vmul.f32 %v1837, 1.442695
    %v1839 = vpow.pop %v1838
    %v1840 = vadd.f32 %v1839, 1.0
    %v1841 = vrcp.pop %v1840
    %v1842 = vmul.f32 1.0, %v1841
    %v1843 = vmul.f32 %v1835, %v1673
    %v1844 = vmul.f32 %v1829, %v1836
    %v1845 = vadd.f32 %v1843, %v1844
    %v1846 = vtanh.pop %v1845
    %v1847 = vmul.f32 %v1842, %v1846
    %s1848 = scalar_lea.vmem [#allocation15], 56
    %1849 = vst [vmem:[%s1848] sm:$0xff] %v1847
    %1850 = vst [vmem:[#allocation2] sm:$0xff] %v1847
    %1851 = vst [vmem:[#allocation3] sm:$0xff] %v1845
    // Predicated region
    $region54: #{tpu_custom_call.1} parent=1 // pred_check
      %p1852 = pneg %p104
    $region55: #{tpu_custom_call.1} parent=1 // pred_check_branch
      %1854 = sbr.rel (%p1852) target = $region57
    $region56: #{tpu_custom_call.1} parent=1 // pred_region
      %1855 = vst [vmem:[#allocation16] sm:$0xff] %v1847
      %1856 = vst [vmem:[#allocation18] sm:$0xff] %v1845
    $region57: #{tpu_custom_call.1} parent=1 // pred_fallthru
      _
    // Predicated region
    $region58: #{tpu_custom_call.1} parent=1 // pred_check
      _
    $region59: #{tpu_custom_call.1} parent=1 // pred_check_branch
      %1858 = sbr.rel (0) target = $region61
    $region60: #{tpu_custom_call.1} parent=1 // pred_region
      %s1860 = ssub.s32 1024, 1024
      %1861 = vsyncadd [#allocation6], %s1860
      %s1862 = sshll.u32 [#allocation15], 4
      %s1863 = int_to_ptr.vmem [resolvable:$true] %s1862
      %1868 = dma.vmem_to_hbm [thread:$0]  %s1863, 1024, %s6, [#allocation6], 128, 128, 8
    $region61: #{tpu_custom_call.1} parent=1 // pred_fallthru
      _
    // Predicated region
    $region62: #{tpu_custom_call.1} parent=1 // pred_check
      _
    $region63: #{tpu_custom_call.1} parent=1 // pred_check_branch
      %1870 = sbr.rel (0) target = $region65
    $region64: #{tpu_custom_call.1} parent=1 // pred_region
      %s1872 = ssub.s32 128, 128
      %1873 = vsyncadd [#allocation17], %s1872
      %s1875 = sshll.u32 [#allocation16], 4
      %s1876 = int_to_ptr.vmem [resolvable:$true] %s1875
      %1878 = dma.vmem_to_hbm [thread:$0]  %s1876, 128, %s7, [#allocation17]
    $region65: #{tpu_custom_call.1} parent=1 // pred_fallthru
      _
    // Predicated region
    $region66: #{tpu_custom_call.1} parent=1 // pred_check
      _
    $region67: #{tpu_custom_call.1} parent=1 // pred_check_branch
      %1880 = sbr.rel (0) target = $region69
    $region68: #{tpu_custom_call.1} parent=1 // pred_region
      %s1882 = ssub.s32 128, 128
      %1883 = vsyncadd [#allocation17], %s1882
      %s1885 = sshll.u32 [#allocation18], 4
      %s1886 = int_to_ptr.vmem [resolvable:$true] %s1885
      %1888 = dma.vmem_to_hbm [thread:$0]  %s1886, 128, %s8, [#allocation17]
    $region69: #{tpu_custom_call.1} parent=1 // pred_fallthru
      _
    // Predicated region
    $region70: #{tpu_custom_call.1} parent=1 // pred_check
      _
    $region71: #{tpu_custom_call.1} parent=1 // pred_check_branch
      %1890 = sbr.rel (0) target = $region73
    $region72: #{tpu_custom_call.1} parent=1 // pred_region
      %1891 = dma.done [#allocation6], 1024
    $region73: #{tpu_custom_call.1} parent=1 // pred_fallthru
      _
    // Predicated region
    $region74: #{tpu_custom_call.1} parent=1 // pred_check
      _
    $region75: #{tpu_custom_call.1} parent=1 // pred_check_branch
      %1893 = sbr.rel (0) target = $region77
    $region76: #{tpu_custom_call.1} parent=1 // pred_region
      %1894 = dma.done [#allocation17], 128
    $region77: #{tpu_custom_call.1} parent=1 // pred_fallthru
      _
    // Predicated region
    $region78: #{tpu_custom_call.1} parent=1 // pred_check
      _
    $region79: #{tpu_custom_call.1} parent=1 // pred_check_branch
      %1896 = sbr.rel (0) target = $region81
    $region80: #{tpu_custom_call.1} parent=1 // pred_region
      %1897 = dma.done [#allocation17], 128
    $region81: #{tpu_custom_call.1} parent=1 // pred_fallthru
      _
    %1898 = vsyncpa [#allocation5], 1
    %1899 = vsyncpa [#allocation8], 1
    %1900 = vsyncpa [#allocation11], 1
    %1901 = vsyncpa [#allocation14], 1
    %1902 = vsyncpa [#allocation6], 1
    %1903 = vsyncpa [#allocation17], 1

</llo_original>
